<compile_context>
chip_gen: v6e
topology: v6e:2x2x1
jax: 0.10.0
libtpu: 0.0.40
codegen_flags: <defaults>
</compile_context>

<pallas_src>
import jax
import jax.numpy as jnp
import numpy as np
from jax import lax
from jax.experimental import pallas as pl
from jax.experimental.pallas import tpu as pltpu

NEG_SLOPE = 0.01   # nn.LeakyReLU() default
BN_EPS = 1e-5      # nn.BatchNorm2d default


# ---------------------------------------------------------------------------
# In-kernel helpers
# ---------------------------------------------------------------------------
def _fill_kw_expanded(interior, kexp_ref):
    """Write kexp[i, w, kw*C + c] = zero_padded_input[i, w + kw, c].

    `interior` is the (Ho, Wo, C) un-padded conv input held in registers.
    kexp_ref has shape (Ho + 2, Wo, 3*C).  The kw=0/2 edge-column zeros are
    baked into the value we store, so only the top/bottom halo rows need an
    explicit zero store (no full-buffer zeroing).
    """
    Ho, Wo, C = interior.shape
    x = interior.astype(kexp_ref.dtype)
    zc = jnp.zeros((Ho, 1, C), kexp_ref.dtype)
    row = jnp.concatenate([
        jnp.concatenate([zc, x[:, :Wo - 1, :]], axis=1),   # kw = 0 tap
        x,                                                 # kw = 1 tap
        jnp.concatenate([x[:, 1:, :], zc], axis=1),        # kw = 2 tap
    ], axis=2)                                             # (Ho, Wo, 3*C)
    kexp_ref[1:Ho + 1] = row
    zr = jnp.zeros((1, Wo, 3 * C), kexp_ref.dtype)
    kexp_ref[0:1] = zr
    kexp_ref[Ho + 1:Ho + 2] = zr


def _conv3x3_bn_lrelu(kexp_ref, w_ref, b_ref):
    """3x3 conv (BN scale pre-folded into w) + bias + LeakyReLU.

    kexp_ref: (Ho+2, Wo, 3*C) bf16 kw-expanded input slab.
    w_ref:    (3, 3*C, Cp)    bf16 weights, row index = kw*C + c.
    b_ref:    (1, Cp)         f32 effective bias.
    Returns (Ho*Wo, Cp) f32.
    """
    Hp, Wo, C3 = kexp_ref.shape
    Ho = Hp - 2
    M = Ho * Wo
    Cp = w_ref.shape[2]
    acc = jnp.zeros((M, Cp), jnp.float32)
    for kh in range(3):                       # 3 matmuls, K = 3*C each
        lhs = kexp_ref[kh:kh + Ho].reshape(M, C3)
        acc = acc + jnp.dot(lhs, w_ref[kh],
                            preferred_element_type=jnp.float32)
    y = acc + b_ref[...]
    return jnp.where(y > 0, y, NEG_SLOPE * y)


# ---------------------------------------------------------------------------
# Fused kernel: 2x2 max-pool -> conv3x3+BN+LReLU -> conv3x3+BN+LReLU
# One grid step processes one image entirely from VMEM.
# ---------------------------------------------------------------------------
def _down_block_kernel(x_ref, w1_ref, w2_ref, b1_ref, b2_ref, o_ref,
                       kexp1_ref, kexp2_ref):
    Ho, Wo, Cout = o_ref.shape
    Cin = kexp1_ref.shape[2] // 3
    Cp = kexp2_ref.shape[2] // 3

    # ---- fused MaxPool2d(2) ------------------------------------------------
    # x_ref block is (2*Ho, Wo, 2*Cin): adjacent W pixels packed on the lane
    # axis (free reshape in the wrapper), so pooling is a leading-dim split
    # plus a static lane split.
    xv = x_ref[...]                                      # (2*Ho, Wo, 2*Cin)
    xv = xv.reshape(Ho, 2, Wo, 2 * Cin)
    rmax = jnp.maximum(xv[:, 0], xv[:, 1])               # pool over H pairs
    pooled = jnp.maximum(rmax[:, :, :Cin], rmax[:, :, Cin:])   # pool over W pairs

    # ---- conv1 (+ folded BN) + LeakyReLU ------------------------------------
    _fill_kw_expanded(pooled, kexp1_ref)
    y1 = _conv3x3_bn_lrelu(kexp1_ref, w1_ref, b1_ref)    # (M, Cp) f32
    # TODO(synk): training-mode Dropout / batch-stat BatchNorm not implemented
    # (eval semantics: Dropout = identity, BN uses running statistics).

    # ---- conv2 (+ folded BN) + LeakyReLU ------------------------------------
    # conv2 input stays in VMEM — no HBM round trip of the intermediate.
    _fill_kw_expanded(y1.reshape(Ho, Wo, Cp), kexp2_ref)
    y2 = _conv3x3_bn_lrelu(kexp2_ref, w2_ref, b2_ref)    # (M, Cp) f32

    # De-padded, per-image store: only the real Cout lanes go back to HBM.
    o_ref[...] = y2[:, :Cout].reshape(Ho, Wo, Cout).astype(o_ref.dtype)


# ---------------------------------------------------------------------------
# Wrapper: layout glue (NCHW<->NHWC), weight/affine prep, pallas_call.
# ---------------------------------------------------------------------------
def down_block_forward(x_nchw, params):
    N, Cin, H, W = x_nchw.shape
    assert H % 2 == 0 and W % 2 == 0, "MaxPool2d(2) requires even H, W"
    Ho, Wo = H // 2, W // 2
    Cout = params["w1"].shape[0]
    Cp = max(128, ((Cout + 127) // 128) * 128)   # lane-dense MXU N dim

    # NCHW -> NHWC (boundary glue), then a free row-major reshape that packs
    # adjacent W-pixel pairs onto the lane axis for the in-kernel pool.
    # TODO(synk): keep the surrounding model NHWC to drop these boundary
    # transposes (each is a full HBM pass outside the kernel).
    x_nhwc = jnp.transpose(x_nchw, (0, 2, 3, 1))
    xr = x_nhwc.reshape(N, H, Wo, 2 * Cin)

    def bn_fold(bias, bn):
        gamma, beta, mean, var = bn
        scale = gamma / jnp.sqrt(var + BN_EPS)
        bias_eff = (bias - mean) * scale + beta
        return scale, bias_eff

    s1, bias1 = bn_fold(params["b1"], params["bn1"])
    s2, bias2 = bn_fold(params["b2"], params["bn2"])

    def prep_w(w, scale, ci_pad, co_pad):
        # OIHW -> (kh, kw, ci, co); fold BN scale in f32, zero-pad ci/co,
        # reshape to (3, 3*ci_pad, co_pad) with row index kw*ci_pad + ci,
        # ship as bf16 (MXU-native).
        co, ci = w.shape[0], w.shape[1]
        wm = jnp.transpose(w, (2, 3, 1, 0)).astype(jnp.float32)   # (3,3,ci,co)
        wm = wm * scale[None, None, None, :]                      # BN fold (f32)
        wm = jnp.pad(wm, ((0, 0), (0, 0), (0, ci_pad - ci), (0, co_pad - co)))
        return wm.reshape(3, 3 * ci_pad, co_pad).astype(jnp.bfloat16)

    w1p = prep_w(params["w1"], s1, Cin, Cp)       # (3, 3*Cin, Cp)
    w2p = prep_w(params["w2"], s2, Cp, Cp)        # (3, 3*Cp,  Cp)

    def prep_b(bias_eff):
        return jnp.pad(bias_eff, (0, Cp - bias_eff.shape[0])) \
                  .reshape(1, Cp).astype(jnp.float32)

    b1p = prep_b(bias1)
    b2p = prep_b(bias2)

    out = pl.pallas_call(
        _down_block_kernel,
        out_shape=jax.ShapeDtypeStruct((N, Ho, Wo, Cout), jnp.float32),
        grid_spec=pltpu.PrefetchScalarGridSpec(
            num_scalar_prefetch=0,
            grid=(N,),
            # TODO(synk): for large spatial/channel sizes add an Ho row-tile
            # grid axis (1-row halo) so a step fits v7x's 64 MiB VMEM.
            in_specs=[
                pl.BlockSpec((None, H, Wo, 2 * Cin), lambda n: (n, 0, 0, 0)),
                pl.BlockSpec((3, 3 * Cin, Cp), lambda n: (0, 0, 0)),
                pl.BlockSpec((3, 3 * Cp, Cp), lambda n: (0, 0, 0)),
                pl.BlockSpec((1, Cp), lambda n: (0, 0)),
                pl.BlockSpec((1, Cp), lambda n: (0, 0)),
            ],
            out_specs=pl.BlockSpec((None, Ho, Wo, Cout), lambda n: (n, 0, 0, 0)),
            scratch_shapes=[
                pltpu.VMEM((Ho + 2, Wo, 3 * Cin), jnp.bfloat16),   # conv1 slab
                pltpu.VMEM((Ho + 2, Wo, 3 * Cp), jnp.bfloat16),    # conv2 slab
            ],
        ),
        compiler_params=pltpu.CompilerParams(
            dimension_semantics=("parallel",),
            vmem_limit_bytes=32 * 1024 * 1024,
        ),
    )(xr, w1p, w2p, b1p, b2p)

    return jnp.transpose(out, (0, 3, 1, 2))       # NHWC -> NCHW


# ---------------------------------------------------------------------------
# Deterministic parameter init (shapes from DownBlock.__init__, attention='no')
# ---------------------------------------------------------------------------
def init_params(key, cin, cout):
    ks = jax.random.split(key, 4)

    def conv_init(k, co, ci):
        bound = 1.0 / np.sqrt(ci * 9)
        kw_, kb_ = jax.random.split(k)
        w = jax.random.uniform(kw_, (co, ci, 3, 3), jnp.float32, -bound, bound)
        b = jax.random.uniform(kb_, (co,), jnp.float32, -bound, bound)
        return w, b

    def bn_init(k, c):
        k1, k2, k3, k4 = jax.random.split(k, 4)
        gamma = 1.0 + 0.1 * jax.random.normal(k1, (c,), jnp.float32)
        beta = 0.1 * jax.random.normal(k2, (c,), jnp.float32)
        mean = 0.1 * jax.random.normal(k3, (c,), jnp.float32)
        var = jax.random.uniform(k4, (c,), jnp.float32, 0.5, 1.5)
        return (gamma, beta, mean, var)

    w1, b1 = conv_init(ks[0], cout, cin)
    w2, b2 = conv_init(ks[1], cout, cout)
    return dict(w1=w1, b1=b1, bn1=bn_init(ks[2], cout),
                w2=w2, b2=b2, bn2=bn_init(ks[3], cout))


# Pure-JAX references (eval-mode semantics).  match_kernel=True mirrors the
# kernel's precision exactly (bf16 MXU operands, BN scale folded into the
# weights before the bf16 cast, f32 accumulation / bias).
def reference_forward(x_nchw, params, *, match_kernel):
    x = lax.reduce_window(
        x_nchw, jnp.asarray(-jnp.inf, x_nchw.dtype), lax.max,
        (1, 1, 2, 2), (1, 1, 2, 2), "VALID")

    def block(x, w, b, bn):
        gamma, beta, mean, var = bn
        scale = gamma / jnp.sqrt(var + BN_EPS)
        bias_eff = (b - mean) * scale + beta
        if match_kernel:
            wf = (w * scale[:, None, None, None]).astype(jnp.bfloat16)
            y = lax.conv_general_dilated(
                x.astype(jnp.bfloat16), wf, (1, 1), "SAME",
                dimension_numbers=("NCHW", "OIHW", "NCHW"),
                preferred_element_type=jnp.float32)
            y = y + bias_eff[None, :, None, None]
        else:
            y = lax.conv_general_dilated(
                x, w, (1, 1), "SAME",
                dimension_numbers=("NCHW", "OIHW", "NCHW"),
                precision=lax.Precision.HIGHEST)
            y = y * scale[None, :, None, None] + bias_eff[None, :, None, None]
        return jnp.where(y > 0, y, NEG_SLOPE * y)

    x = block(x, params["w1"], params["b1"], params["bn1"])
    x = block(x, params["w2"], params["b2"], params["bn2"])
    return x


if __name__ == "__main__":
    key = jax.random.PRNGKey(0)
    kx, kp = jax.random.split(key)

    N, CIN, COUT, S = 2, 4, 8, 16            # x: [2, 4, 16, 16]
    x = jax.random.normal(kx, (N, CIN, S, S), jnp.float32)
    params = init_params(kp, CIN, COUT)

    out = jax.jit(down_block_forward)(x, params)
    out = jax.block_until_ready(out)
    assert out.shape == (N, COUT, S // 2, S // 2), out.shape

    # Tight check vs. a reference computed at the kernel's exact precision
    # (bf16 MXU operands, BN scale folded pre-cast, f32 accumulation).
    ref_matched = reference_forward(x, params, match_kernel=True)
    np.testing.assert_allclose(np.asarray(out), np.asarray(ref_matched),
                               rtol=1e-2, atol=1e-2)
    # Loose check vs. the full-fp32 PyTorch-equivalent reference
    # (bf16 MXU operands => relaxed tolerance).
    ref_f32 = reference_forward(x, params, match_kernel=False)
    np.testing.assert_allclose(np.asarray(out), np.asarray(ref_f32),
                               rtol=1e-1, atol=1e-1)
    print("KERNEL_OK")
</pallas_src>

<mosaic_0001>
module attributes {stable_mosaic.version = 11 : i64} {
  func.func @_down_block_kernel(%arg0: i32, %arg1: memref<1x16x8x8xf32, #tpu.memory_space<vmem>>, %arg2: memref<3x12x128xbf16, #tpu.memory_space<vmem>>, %arg3: memref<3x384x128xbf16, #tpu.memory_space<vmem>>, %arg4: memref<1x128xf32, #tpu.memory_space<vmem>>, %arg5: memref<1x128xf32, #tpu.memory_space<vmem>>, %arg6: memref<1x8x8x8xf32, #tpu.memory_space<vmem>>, %arg7: memref<10x8x12xbf16, #tpu.memory_space<vmem>>, %arg8: memref<10x8x384xbf16, #tpu.memory_space<vmem>>) attributes {dimension_semantics = [#tpu.dimension_semantics<parallel>], iteration_bounds = array<i64: 2>, scalar_prefetch = 0 : i64, scratch_operands = 2 : i64, tpu.core_type = #tpu.core_type<tc>, window_params = [{transform_indices = @transform_0, window_bounds = array<i64: 1, 16, 8, 8>}, {pipeline_mode = #tpu.pipeline_mode<synchronous>, transform_indices = @transform_1, window_bounds = array<i64: 3, 12, 128>}, {pipeline_mode = #tpu.pipeline_mode<synchronous>, transform_indices = @transform_2, window_bounds = array<i64: 3, 384, 128>}, {pipeline_mode = #tpu.pipeline_mode<synchronous>, transform_indices = @transform_3, window_bounds = array<i64: 1, 128>}, {pipeline_mode = #tpu.pipeline_mode<synchronous>, transform_indices = @transform_4, window_bounds = array<i64: 1, 128>}, {transform_indices = @transform_5, window_bounds = array<i64: 1, 8, 8, 8>}]} {
    %c0 = arith.constant 0 : index
    %c0_0 = arith.constant 0 : index
    %c0_1 = arith.constant 0 : index
    %c0_2 = arith.constant 0 : index
    %0 = vector.load %arg1[%c0, %c0_0, %c0_1, %c0_2] : memref<1x16x8x8xf32, #tpu.memory_space<vmem>>, vector<1x16x8x8xf32>
    %1 = vector.shape_cast %0 : vector<1x16x8x8xf32> to vector<16x8x8xf32>
    %2 = vector.shape_cast %1 : vector<16x8x8xf32> to vector<8x2x8x8xf32>
    %3 = vector.extract_strided_slice %2 {offsets = [0, 0, 0, 0], sizes = [8, 1, 8, 8], strides = [1, 1, 1, 1]} : vector<8x2x8x8xf32> to vector<8x1x8x8xf32>
    %4 = vector.shape_cast %3 : vector<8x1x8x8xf32> to vector<8x8x8xf32>
    %5 = vector.extract_strided_slice %2 {offsets = [0, 1, 0, 0], sizes = [8, 1, 8, 8], strides = [1, 1, 1, 1]} : vector<8x2x8x8xf32> to vector<8x1x8x8xf32>
    %6 = vector.shape_cast %5 : vector<8x1x8x8xf32> to vector<8x8x8xf32>
    %7 = arith.maximumf %4, %6 : vector<8x8x8xf32>
    %8 = vector.extract_strided_slice %7 {offsets = [0, 0, 0], sizes = [8, 8, 4], strides = [1, 1, 1]} : vector<8x8x8xf32> to vector<8x8x4xf32>
    %9 = vector.extract_strided_slice %7 {offsets = [0, 0, 4], sizes = [8, 8, 4], strides = [1, 1, 1]} : vector<8x8x8xf32> to vector<8x8x4xf32>
    %10 = arith.maximumf %8, %9 : vector<8x8x4xf32>
    %11 = arith.truncf %10 : vector<8x8x4xf32> to vector<8x8x4xbf16>
    %cst = arith.constant 0.000000e+00 : bf16
    %12 = vector.broadcast %cst : bf16 to vector<8x1x4xbf16>
    %13 = vector.extract_strided_slice %11 {offsets = [0, 0, 0], sizes = [8, 7, 4], strides = [1, 1, 1]} : vector<8x8x4xbf16> to vector<8x7x4xbf16>
    %14 = tpu.concatenate %12, %13 in 1 : vector<8x1x4xbf16>, vector<8x7x4xbf16> -> vector<8x8x4xbf16>
    %15 = vector.extract_strided_slice %11 {offsets = [0, 1, 0], sizes = [8, 7, 4], strides = [1, 1, 1]} : vector<8x8x4xbf16> to vector<8x7x4xbf16>
    %16 = tpu.concatenate %15, %12 in 1 : vector<8x7x4xbf16>, vector<8x1x4xbf16> -> vector<8x8x4xbf16>
    %17 = tpu.concatenate %14, %11, %16 in 2 : vector<8x8x4xbf16>, vector<8x8x4xbf16>, vector<8x8x4xbf16> -> vector<8x8x12xbf16>
    %c1 = arith.constant 1 : index
    %c0_3 = arith.constant 0 : index
    %c0_4 = arith.constant 0 : index
    %18 = vector.load %arg7[%c1, %c0_3, %c0_4] : memref<10x8x12xbf16, #tpu.memory_space<vmem>>, vector<8x8x12xbf16>
    tpu.vector_store %arg7[%c1, %c0_3, %c0_4], %17 {strides = array<i32>} : memref<10x8x12xbf16, #tpu.memory_space<vmem>>, vector<8x8x12xbf16>,
    %cst_5 = arith.constant 0.000000e+00 : bf16
    %19 = vector.broadcast %cst_5 : bf16 to vector<1x8x12xbf16>
    %c0_6 = arith.constant 0 : index
    %c0_7 = arith.constant 0 : index
    %c0_8 = arith.constant 0 : index
    %20 = vector.load %arg7[%c0_6, %c0_7, %c0_8] : memref<10x8x12xbf16, #tpu.memory_space<vmem>>, vector<1x8x12xbf16>
    tpu.vector_store %arg7[%c0_6, %c0_7, %c0_8], %19 {strides = array<i32>} : memref<10x8x12xbf16, #tpu.memory_space<vmem>>, vector<1x8x12xbf16>,
    %c9 = arith.constant 9 : index
    %c0_9 = arith.constant 0 : index
    %c0_10 = arith.constant 0 : index
    %21 = vector.load %arg7[%c9, %c0_9, %c0_10] : memref<10x8x12xbf16, #tpu.memory_space<vmem>>, vector<1x8x12xbf16>
    tpu.vector_store %arg7[%c9, %c0_9, %c0_10], %19 {strides = array<i32>} : memref<10x8x12xbf16, #tpu.memory_space<vmem>>, vector<1x8x12xbf16>,
    %cst_11 = arith.constant 0.000000e+00 : f32
    %22 = vector.broadcast %cst_11 : f32 to vector<64x128xf32>
    %c0_12 = arith.constant 0 : index
    %c0_13 = arith.constant 0 : index
    %c0_14 = arith.constant 0 : index
    %23 = vector.load %arg7[%c0_12, %c0_13, %c0_14] : memref<10x8x12xbf16, #tpu.memory_space<vmem>>, vector<8x8x12xbf16>
    %24 = vector.shape_cast %23 : vector<8x8x12xbf16> to vector<64x12xbf16>
    %c0_15 = arith.constant 0 : index
    %c0_16 = arith.constant 0 : index
    %c0_17 = arith.constant 0 : index
    %25 = vector.load %arg2[%c0_15, %c0_16, %c0_17] : memref<3x12x128xbf16, #tpu.memory_space<vmem>>, vector<1x12x128xbf16>
    %26 = vector.shape_cast %25 : vector<1x12x128xbf16> to vector<12x128xbf16>
    %cst_18 = arith.constant dense<0.000000e+00> : vector<64x128xf32>
    %27 = tpu.matmul %24, %26, %cst_18 {dimension_numbers = #tpu.dot_dimension_numbers<[1], [0], [0], [1], [0, 0, 1, 1], [], []>} : vector<64x12xbf16>, vector<12x128xbf16>, vector<64x128xf32> -> vector<64x128xf32>
    %28 = arith.addf %22, %27 : vector<64x128xf32>
    %c1_19 = arith.constant 1 : index
    %c0_20 = arith.constant 0 : index
    %c0_21 = arith.constant 0 : index
    %29 = vector.load %arg7[%c1_19, %c0_20, %c0_21] : memref<10x8x12xbf16, #tpu.memory_space<vmem>>, vector<8x8x12xbf16>
    %30 = vector.shape_cast %29 : vector<8x8x12xbf16> to vector<64x12xbf16>
    %c1_22 = arith.constant 1 : index
    %c0_23 = arith.constant 0 : index
    %c0_24 = arith.constant 0 : index
    %31 = vector.load %arg2[%c1_22, %c0_23, %c0_24] : memref<3x12x128xbf16, #tpu.memory_space<vmem>>, vector<1x12x128xbf16>
    %32 = vector.shape_cast %31 : vector<1x12x128xbf16> to vector<12x128xbf16>
    %cst_25 = arith.constant dense<0.000000e+00> : vector<64x128xf32>
    %33 = tpu.matmul %30, %32, %cst_25 {dimension_numbers = #tpu.dot_dimension_numbers<[1], [0], [0], [1], [0, 0, 1, 1], [], []>} : vector<64x12xbf16>, vector<12x128xbf16>, vector<64x128xf32> -> vector<64x128xf32>
    %34 = arith.addf %28, %33 : vector<64x128xf32>
    %c2 = arith.constant 2 : index
    %c0_26 = arith.constant 0 : index
    %c0_27 = arith.constant 0 : index
    %35 = vector.load %arg7[%c2, %c0_26, %c0_27] : memref<10x8x12xbf16, #tpu.memory_space<vmem>>, vector<8x8x12xbf16>
    %36 = vector.shape_cast %35 : vector<8x8x12xbf16> to vector<64x12xbf16>
    %c2_28 = arith.constant 2 : index
    %c0_29 = arith.constant 0 : index
    %c0_30 = arith.constant 0 : index
    %37 = vector.load %arg2[%c2_28, %c0_29, %c0_30] : memref<3x12x128xbf16, #tpu.memory_space<vmem>>, vector<1x12x128xbf16>
    %38 = vector.shape_cast %37 : vector<1x12x128xbf16> to vector<12x128xbf16>
    %cst_31 = arith.constant dense<0.000000e+00> : vector<64x128xf32>
    %39 = tpu.matmul %36, %38, %cst_31 {dimension_numbers = #tpu.dot_dimension_numbers<[1], [0], [0], [1], [0, 0, 1, 1], [], []>} : vector<64x12xbf16>, vector<12x128xbf16>, vector<64x128xf32> -> vector<64x128xf32>
    %40 = arith.addf %34, %39 : vector<64x128xf32>
    %c0_32 = arith.constant 0 : index
    %c0_33 = arith.constant 0 : index
    %41 = vector.load %arg4[%c0_32, %c0_33] : memref<1x128xf32, #tpu.memory_space<vmem>>, vector<1x128xf32>
    %42 = vector.broadcast %41 : vector<1x128xf32> to vector<64x128xf32>
    %43 = arith.addf %40, %42 : vector<64x128xf32>
    %cst_34 = arith.constant 0.000000e+00 : f32
    %44 = vector.broadcast %cst_34 : f32 to vector<64x128xf32>
    %45 = arith.cmpf ogt, %43, %44 : vector<64x128xf32>
    %cst_35 = arith.constant 0.00999999977 : f32
    %46 = vector.broadcast %cst_35 : f32 to vector<64x128xf32>
    %47 = arith.mulf %46, %43 : vector<64x128xf32>
    %48 = arith.select %45, %43, %47 : vector<64x128xi1>, vector<64x128xf32>
    %49 = vector.shape_cast %48 : vector<64x128xf32> to vector<8x8x128xf32>
    %50 = arith.truncf %49 : vector<8x8x128xf32> to vector<8x8x128xbf16>
    %cst_36 = arith.constant 0.000000e+00 : bf16
    %51 = vector.broadcast %cst_36 : bf16 to vector<8x1x128xbf16>
    %52 = vector.extract_strided_slice %50 {offsets = [0, 0, 0], sizes = [8, 7, 128], strides = [1, 1, 1]} : vector<8x8x128xbf16> to vector<8x7x128xbf16>
    %53 = tpu.concatenate %51, %52 in 1 : vector<8x1x128xbf16>, vector<8x7x128xbf16> -> vector<8x8x128xbf16>
    %54 = vector.extract_strided_slice %50 {offsets = [0, 1, 0], sizes = [8, 7, 128], strides = [1, 1, 1]} : vector<8x8x128xbf16> to vector<8x7x128xbf16>
    %55 = tpu.concatenate %54, %51 in 1 : vector<8x7x128xbf16>, vector<8x1x128xbf16> -> vector<8x8x128xbf16>
    %56 = tpu.concatenate %53, %50, %55 in 2 : vector<8x8x128xbf16>, vector<8x8x128xbf16>, vector<8x8x128xbf16> -> vector<8x8x384xbf16>
    %c1_37 = arith.constant 1 : index
    %c0_38 = arith.constant 0 : index
    %c0_39 = arith.constant 0 : index
    %57 = vector.load %arg8[%c1_37, %c0_38, %c0_39] : memref<10x8x384xbf16, #tpu.memory_space<vmem>>, vector<8x8x384xbf16>
    tpu.vector_store %arg8[%c1_37, %c0_38, %c0_39], %56 {strides = array<i32>} : memref<10x8x384xbf16, #tpu.memory_space<vmem>>, vector<8x8x384xbf16>,
    %cst_40 = arith.constant 0.000000e+00 : bf16
    %58 = vector.broadcast %cst_40 : bf16 to vector<1x8x384xbf16>
    %c0_41 = arith.constant 0 : index
    %c0_42 = arith.constant 0 : index
    %c0_43 = arith.constant 0 : index
    %59 = vector.load %arg8[%c0_41, %c0_42, %c0_43] : memref<10x8x384xbf16, #tpu.memory_space<vmem>>, vector<1x8x384xbf16>
    tpu.vector_store %arg8[%c0_41, %c0_42, %c0_43], %58 {strides = array<i32>} : memref<10x8x384xbf16, #tpu.memory_space<vmem>>, vector<1x8x384xbf16>,
    %c9_44 = arith.constant 9 : index
    %c0_45 = arith.constant 0 : index
    %c0_46 = arith.constant 0 : index
    %60 = vector.load %arg8[%c9_44, %c0_45, %c0_46] : memref<10x8x384xbf16, #tpu.memory_space<vmem>>, vector<1x8x384xbf16>
    tpu.vector_store %arg8[%c9_44, %c0_45, %c0_46], %58 {strides = array<i32>} : memref<10x8x384xbf16, #tpu.memory_space<vmem>>, vector<1x8x384xbf16>,
    %cst_47 = arith.constant 0.000000e+00 : f32
    %61 = vector.broadcast %cst_47 : f32 to vector<64x128xf32>
    %c0_48 = arith.constant 0 : index
    %c0_49 = arith.constant 0 : index
    %c0_50 = arith.constant 0 : index
    %62 = vector.load %arg8[%c0_48, %c0_49, %c0_50] : memref<10x8x384xbf16, #tpu.memory_space<vmem>>, vector<8x8x384xbf16>
    %63 = vector.shape_cast %62 : vector<8x8x384xbf16> to vector<64x384xbf16>
    %c0_51 = arith.constant 0 : index
    %c0_52 = arith.constant 0 : index
    %c0_53 = arith.constant 0 : index
    %64 = vector.load %arg3[%c0_51, %c0_52, %c0_53] : memref<3x384x128xbf16, #tpu.memory_space<vmem>>, vector<1x384x128xbf16>
    %65 = vector.shape_cast %64 : vector<1x384x128xbf16> to vector<384x128xbf16>
    %cst_54 = arith.constant dense<0.000000e+00> : vector<64x128xf32>
    %66 = tpu.matmul %63, %65, %cst_54 {dimension_numbers = #tpu.dot_dimension_numbers<[1], [0], [0], [1], [0, 0, 1, 1], [], []>} : vector<64x384xbf16>, vector<384x128xbf16>, vector<64x128xf32> -> vector<64x128xf32>
    %67 = arith.addf %61, %66 : vector<64x128xf32>
    %c1_55 = arith.constant 1 : index
    %c0_56 = arith.constant 0 : index
    %c0_57 = arith.constant 0 : index
    %68 = vector.load %arg8[%c1_55, %c0_56, %c0_57] : memref<10x8x384xbf16, #tpu.memory_space<vmem>>, vector<8x8x384xbf16>
    %69 = vector.shape_cast %68 : vector<8x8x384xbf16> to vector<64x384xbf16>
    %c1_58 = arith.constant 1 : index
    %c0_59 = arith.constant 0 : index
    %c0_60 = arith.constant 0 : index
    %70 = vector.load %arg3[%c1_58, %c0_59, %c0_60] : memref<3x384x128xbf16, #tpu.memory_space<vmem>>, vector<1x384x128xbf16>
    %71 = vector.shape_cast %70 : vector<1x384x128xbf16> to vector<384x128xbf16>
    %cst_61 = arith.constant dense<0.000000e+00> : vector<64x128xf32>
    %72 = tpu.matmul %69, %71, %cst_61 {dimension_numbers = #tpu.dot_dimension_numbers<[1], [0], [0], [1], [0, 0, 1, 1], [], []>} : vector<64x384xbf16>, vector<384x128xbf16>, vector<64x128xf32> -> vector<64x128xf32>
    %73 = arith.addf %67, %72 : vector<64x128xf32>
    %c2_62 = arith.constant 2 : index
    %c0_63 = arith.constant 0 : index
    %c0_64 = arith.constant 0 : index
    %74 = vector.load %arg8[%c2_62, %c0_63, %c0_64] : memref<10x8x384xbf16, #tpu.memory_space<vmem>>, vector<8x8x384xbf16>
    %75 = vector.shape_cast %74 : vector<8x8x384xbf16> to vector<64x384xbf16>
    %c2_65 = arith.constant 2 : index
    %c0_66 = arith.constant 0 : index
    %c0_67 = arith.constant 0 : index
    %76 = vector.load %arg3[%c2_65, %c0_66, %c0_67] : memref<3x384x128xbf16, #tpu.memory_space<vmem>>, vector<1x384x128xbf16>
    %77 = vector.shape_cast %76 : vector<1x384x128xbf16> to vector<384x128xbf16>
    %cst_68 = arith.constant dense<0.000000e+00> : vector<64x128xf32>
    %78 = tpu.matmul %75, %77, %cst_68 {dimension_numbers = #tpu.dot_dimension_numbers<[1], [0], [0], [1], [0, 0, 1, 1], [], []>} : vector<64x384xbf16>, vector<384x128xbf16>, vector<64x128xf32> -> vector<64x128xf32>
    %79 = arith.addf %73, %78 : vector<64x128xf32>
    %c0_69 = arith.constant 0 : index
    %c0_70 = arith.constant 0 : index
    %80 = vector.load %arg5[%c0_69, %c0_70] : memref<1x128xf32, #tpu.memory_space<vmem>>, vector<1x128xf32>
    %81 = vector.broadcast %80 : vector<1x128xf32> to vector<64x128xf32>
    %82 = arith.addf %79, %81 : vector<64x128xf32>
    %cst_71 = arith.constant 0.000000e+00 : f32
    %83 = vector.broadcast %cst_71 : f32 to vector<64x128xf32>
    %84 = arith.cmpf ogt, %82, %83 : vector<64x128xf32>
    %cst_72 = arith.constant 0.00999999977 : f32
    %85 = vector.broadcast %cst_72 : f32 to vector<64x128xf32>
    %86 = arith.mulf %85, %82 : vector<64x128xf32>
    %87 = arith.select %84, %82, %86 : vector<64x128xi1>, vector<64x128xf32>
    %88 = vector.extract_strided_slice %87 {offsets = [0, 0], sizes = [64, 8], strides = [1, 1]} : vector<64x128xf32> to vector<64x8xf32>
    %89 = vector.shape_cast %88 : vector<64x8xf32> to vector<8x8x8xf32>
    %c0_73 = arith.constant 0 : index
    %c0_74 = arith.constant 0 : index
    %c0_75 = arith.constant 0 : index
    %c0_76 = arith.constant 0 : index
    %90 = vector.load %arg6[%c0_73, %c0_74, %c0_75, %c0_76] : memref<1x8x8x8xf32, #tpu.memory_space<vmem>>, vector<1x8x8x8xf32>
    %91 = vector.shape_cast %90 : vector<1x8x8x8xf32> to vector<8x8x8xf32>
    %92 = vector.shape_cast %89 : vector<8x8x8xf32> to vector<1x8x8x8xf32>
    tpu.vector_store %arg6[%c0_73, %c0_74, %c0_75, %c0_76], %92 {strides = array<i32>} : memref<1x8x8x8xf32, #tpu.memory_space<vmem>>, vector<1x8x8x8xf32>,
    return
  }
  func.func @transform_0(%arg0: i32) -> (i32, i32, i32, i32) {
    %c0_i32 = arith.constant 0 : i32
    %c0_i32_0 = arith.constant 0 : i32
    %c0_i32_1 = arith.constant 0 : i32
    %c0_i32_2 = arith.constant 0 : i32
    return %arg0, %c0_i32, %c0_i32_0, %c0_i32_1 : i32, i32, i32, i32
  }
  func.func @transform_1(%arg0: i32) -> (i32, i32, i32) {
    %c0_i32 = arith.constant 0 : i32
    %c0_i32_0 = arith.constant 0 : i32
    %c0_i32_1 = arith.constant 0 : i32
    %c0_i32_2 = arith.constant 0 : i32
    return %c0_i32, %c0_i32_0, %c0_i32_1 : i32, i32, i32
  }
  func.func @transform_2(%arg0: i32) -> (i32, i32, i32) {
    %c0_i32 = arith.constant 0 : i32
    %c0_i32_0 = arith.constant 0 : i32
    %c0_i32_1 = arith.constant 0 : i32
    %c0_i32_2 = arith.constant 0 : i32
    return %c0_i32, %c0_i32_0, %c0_i32_1 : i32, i32, i32
  }
  func.func @transform_3(%arg0: i32) -> (i32, i32) {
    %c0_i32 = arith.constant 0 : i32
    %c0_i32_0 = arith.constant 0 : i32
    %c0_i32_1 = arith.constant 0 : i32
    return %c0_i32, %c0_i32_0 : i32, i32
  }
  func.func @transform_4(%arg0: i32) -> (i32, i32) {
    %c0_i32 = arith.constant 0 : i32
    %c0_i32_0 = arith.constant 0 : i32
    %c0_i32_1 = arith.constant 0 : i32
    return %c0_i32, %c0_i32_0 : i32, i32
  }
  func.func @transform_5(%arg0: i32) -> (i32, i32, i32, i32) {
    %c0_i32 = arith.constant 0 : i32
    %c0_i32_0 = arith.constant 0 : i32
    %c0_i32_1 = arith.constant 0 : i32
    %c0_i32_2 = arith.constant 0 : i32
    return %arg0, %c0_i32, %c0_i32_0, %c0_i32_1 : i32, i32, i32, i32
  }
}

</mosaic_0001>

<llo_original>
// kernel: down_block_forward.1
$region0: #{down_block_forward.1}
  #allocation0 [shape = 'u32[]', space=smem, size = 0x4, offset = 0x4, fixed_abs, tag = 'smem constant byte address 0x4 - core index']
  #allocation1 [shape = 'u32[144,128]{1,0:T(1,128)}', space=vmem, size = 0x12000, scoped, tag = 'internal scratch']
  #allocation2 [shape = 'bf16[10,8,12]{2,1,0:T(8,128)(2,1)}', space=vmem, size = 0x5000, scoped, tag = 'scratch operand']
  #allocation3 [shape = 'bf16[10,8,384]{2,1,0:T(8,128)(2,1)}', space=vmem, size = 0xf000, scoped, tag = 'scratch operand']
  %s0 = inlined_call_operand.vmem [shape: f32[2,16,8,8], index: 0, kind: input, shape index: {}]
  %s1 = inlined_call_operand.vmem [shape: bf16[3,12,128], index: 1, kind: input, shape index: {}]
  %s2 = inlined_call_operand.vmem [shape: bf16[3,384,128], index: 2, kind: input, shape index: {}]
  %s3 = inlined_call_operand.vmem [shape: f32[1,128], index: 3, kind: input, shape index: {}]
  %s4 = inlined_call_operand.vmem [shape: f32[1,128], index: 4, kind: input, shape index: {}]
  %s5 = inlined_call_operand.vmem [shape: f32[2,8,8,8], index: 5, kind: output, shape index: {}]
  %s6 = sld [smem:[#allocation0]]
  $region53: #{down_block_forward.1} parent=0
    _
  %s8 = ssub.s32 1, %s6
  %s9 = scalar_select 0, %s8, %s6
  loop: start=0, step=1, limit=4
  $region2: #{down_block_forward.1} parent=0 // loop_pre_header
    _
  $region3: #{down_block_forward.1} parent=0 // loop_header
    %s11 = sphi 0, %s15
    %p12 = scmp.ge.s32.totalorder %s11, 4
    %s21 = sphi 0, %s23
    %s24 = sphi 0, %s21
    %s25 = sphi 0, %s24
    %s41 = sphi 0, %s25
    %s45 = sphi 0, %s45
    %s47 = sphi 0, %s45
    %s48 = sphi 0, %s47
    %s62 = sphi 0, %s48
    %s66 = sphi 0, %s66
    %s68 = sphi 0, %s66
    %s69 = sphi 0, %s68
    %s83 = sphi 0, %s69
    %s87 = sphi 0, %s87
    %s89 = sphi 0, %s87
    %s90 = sphi 0, %s89
    %s104 = sphi 0, %s90
    %s108 = sphi 0, %s108
    %s110 = sphi 0, %s108
    %s111 = sphi 0, %s110
    %s125 = sphi 0, %s111
    %s131 = sphi 0, %s133
    %s134 = sphi 0, %s131
    %s135 = sphi 0, %s134
    %s151 = sphi 0, %s135
  $region4: #{down_block_forward.1} parent=0 // loop_header_branch
    %14 = sbr.rel (%p12) target = $region8
  $region5: #{down_block_forward.1} parent=0 // loop_body
    %s16 = ssub.s32 %s11, 1
    %s17 = ssub.s32 %s11, 2
    %s18 = sadd.s32 %s11, 1
    %s19 = ssub.s32 %s11, %s18
    %p20 = scmp.eq.s32.totalorder %s19, 0
    %s22 = sadd.s32 %s21, 1
    %s23 = scalar_select %p20, %s21, %s22
    %p26 = pneg %p20
    %p27 = scmp.eq.s32.totalorder %s11, 1
    %p28 = por %p26, %p27
    %p29 = scmp.ne.s32.totalorder %s21, %s24
    %p30 = scmp.eq.s32.totalorder %s11, 0
    %p31 = por %p29, %p30
    %p32 = scmp.ne.s32.totalorder %s21, %s24
    %p33 = scmp.eq.s32.totalorder %s16, 1
    %p34 = por %p32, %p33
    %p35 = scmp.ne.s32.totalorder %s24, %s25
    %p36 = scmp.eq.s32.totalorder %s16, 0
    %p37 = por %p35, %p36
    %p38 = scmp.ne.s32.totalorder %s24, %s25
    %p39 = scmp.eq.s32.totalorder %s17, 1
    %p40 = por %p38, %p39
    %p42 = scmp.ne.s32.totalorder %s25, %s41
    %p43 = scmp.eq.s32.totalorder %s17, 0
    %p44 = por %p42, %p43
    %s46 = sadd.s32 %s45, 1
    %p49 = scmp.eq.s32.totalorder %s11, 1
    %p50 = scmp.ne.s32.totalorder %s45, %s47
    %p51 = scmp.eq.s32.totalorder %s11, 0
    %p52 = por %p50, %p51
    %p53 = scmp.ne.s32.totalorder %s45, %s47
    %p54 = scmp.eq.s32.totalorder %s16, 1
    %p55 = por %p53, %p54
    %p56 = scmp.ne.s32.totalorder %s47, %s48
    %p57 = scmp.eq.s32.totalorder %s16, 0
    %p58 = por %p56, %p57
    %p59 = scmp.ne.s32.totalorder %s47, %s48
    %p60 = scmp.eq.s32.totalorder %s17, 1
    %p61 = por %p59, %p60
    %p63 = scmp.ne.s32.totalorder %s48, %s62
    %p64 = scmp.eq.s32.totalorder %s17, 0
    %p65 = por %p63, %p64
    %s67 = sadd.s32 %s66, 1
    %p70 = scmp.eq.s32.totalorder %s11, 1
    %p71 = scmp.ne.s32.totalorder %s66, %s68
    %p72 = scmp.eq.s32.totalorder %s11, 0
    %p73 = por %p71, %p72
    %p74 = scmp.ne.s32.totalorder %s66, %s68
    %p75 = scmp.eq.s32.totalorder %s16, 1
    %p76 = por %p74, %p75
    %p77 = scmp.ne.s32.totalorder %s68, %s69
    %p78 = scmp.eq.s32.totalorder %s16, 0
    %p79 = por %p77, %p78
    %p80 = scmp.ne.s32.totalorder %s68, %s69
    %p81 = scmp.eq.s32.totalorder %s17, 1
    %p82 = por %p80, %p81
    %p84 = scmp.ne.s32.totalorder %s69, %s83
    %p85 = scmp.eq.s32.totalorder %s17, 0
    %p86 = por %p84, %p85
    %s88 = sadd.s32 %s87, 1
    %p91 = scmp.eq.s32.totalorder %s11, 1
    %p92 = scmp.ne.s32.totalorder %s87, %s89
    %p93 = scmp.eq.s32.totalorder %s11, 0
    %p94 = por %p92, %p93
    %p95 = scmp.ne.s32.totalorder %s87, %s89
    %p96 = scmp.eq.s32.totalorder %s16, 1
    %p97 = por %p95, %p96
    %p98 = scmp.ne.s32.totalorder %s89, %s90
    %p99 = scmp.eq.s32.totalorder %s16, 0
    %p100 = por %p98, %p99
    %p101 = scmp.ne.s32.totalorder %s89, %s90
    %p102 = scmp.eq.s32.totalorder %s17, 1
    %p103 = por %p101, %p102
    %p105 = scmp.ne.s32.totalorder %s90, %s104
    %p106 = scmp.eq.s32.totalorder %s17, 0
    %p107 = por %p105, %p106
    %s109 = sadd.s32 %s108, 1
    %p112 = scmp.eq.s32.totalorder %s11, 1
    %p113 = scmp.ne.s32.totalorder %s108, %s110
    %p114 = scmp.eq.s32.totalorder %s11, 0
    %p115 = por %p113, %p114
    %p116 = scmp.ne.s32.totalorder %s108, %s110
    %p117 = scmp.eq.s32.totalorder %s16, 1
    %p118 = por %p116, %p117
    %p119 = scmp.ne.s32.totalorder %s110, %s111
    %p120 = scmp.eq.s32.totalorder %s16, 0
    %p121 = por %p119, %p120
    %p122 = scmp.ne.s32.totalorder %s110, %s111
    %p123 = scmp.eq.s32.totalorder %s17, 1
    %p124 = por %p122, %p123
    %p126 = scmp.ne.s32.totalorder %s111, %s125
    %p127 = scmp.eq.s32.totalorder %s17, 0
    %p128 = por %p126, %p127
    %s129 = ssub.s32 %s11, %s18
    %p130 = scmp.eq.s32.totalorder %s129, 0
    %s132 = sadd.s32 %s131, 1
    %s133 = scalar_select %p130, %s131, %s132
    %p136 = pneg %p130
    %p137 = scmp.eq.s32.totalorder %s11, 1
    %p138 = por %p136, %p137
    %p139 = scmp.ne.s32.totalorder %s131, %s134
    %p140 = scmp.eq.s32.totalorder %s11, 0
    %p141 = por %p139, %p140
    %p142 = scmp.ne.s32.totalorder %s131, %s134
    %p143 = scmp.eq.s32.totalorder %s16, 1
    %p144 = por %p142, %p143
    %p145 = scmp.ne.s32.totalorder %s134, %s135
    %p146 = scmp.eq.s32.totalorder %s16, 0
    %p147 = por %p145, %p146
    %p148 = scmp.ne.s32.totalorder %s134, %s135
    %p149 = scmp.eq.s32.totalorder %s17, 1
    %p150 = por %p148, %p149
    %p152 = scmp.ne.s32.totalorder %s135, %s151
    %p153 = scmp.eq.s32.totalorder %s17, 0
    %p154 = por %p152, %p153
    %p155 = scmp.le.s32.totalorder 1, %s11
    %p156 = scmp.lt.s32.totalorder %s11, 3
    %p157 = pnand %p155, %p156
    %p158 = pneg %p157
    // Predicated region
    $region9: #{down_block_forward.1} parent=5 // pred_check
      _
    $region10: #{down_block_forward.1} parent=5 // pred_check_branch
      %160 = sbr.rel (%p157) target = $region12
    $region11: #{down_block_forward.1} parent=5 // pred_region
      %s161 = ssub.s32 %s11, 1
      // Predicated region
      $region13: #{down_block_forward.1} parent=11 // pred_check
        %p162 = pneg %p58
      $region14: #{down_block_forward.1} parent=11 // pred_check_branch
        %164 = sbr.rel (%p162) target = $region16
      $region15: #{down_block_forward.1} parent=11 // pred_region
        _
      $region16: #{down_block_forward.1} parent=11 // pred_fallthru
        _
      // Predicated region
      $region17: #{down_block_forward.1} parent=11 // pred_check
        %p165 = pneg %p79
      $region18: #{down_block_forward.1} parent=11 // pred_check_branch
        %167 = sbr.rel (%p165) target = $region20
      $region19: #{down_block_forward.1} parent=11 // pred_region
        _
      $region20: #{down_block_forward.1} parent=11 // pred_fallthru
        _
      // Predicated region
      $region21: #{down_block_forward.1} parent=11 // pred_check
        %p168 = pneg %p100
      $region22: #{down_block_forward.1} parent=11 // pred_check_branch
        %170 = sbr.rel (%p168) target = $region24
      $region23: #{down_block_forward.1} parent=11 // pred_region
        _
      $region24: #{down_block_forward.1} parent=11 // pred_fallthru
        _
      // Predicated region
      $region25: #{down_block_forward.1} parent=11 // pred_check
        %p171 = pneg %p121
      $region26: #{down_block_forward.1} parent=11 // pred_check_branch
        %173 = sbr.rel (%p171) target = $region28
      $region27: #{down_block_forward.1} parent=11 // pred_region
        _
      $region28: #{down_block_forward.1} parent=11 // pred_fallthru
        _
    $region12: #{down_block_forward.1} parent=5 // pred_fallthru
      _
    %p174 = scmp.lt.s32.totalorder %s11, 2
    // Predicated region
    $region29: #{down_block_forward.1} parent=5 // pred_check
      %p175 = pneg %p174
    $region30: #{down_block_forward.1} parent=5 // pred_check_branch
      %177 = sbr.rel (%p175) target = $region32
    $region31: #{down_block_forward.1} parent=5 // pred_region
      // Predicated region
      $region33: #{down_block_forward.1} parent=31 // pred_check
        %p178 = pneg %p31
      $region34: #{down_block_forward.1} parent=31 // pred_check_branch
        %180 = sbr.rel (%p178) target = $region36
      $region35: #{down_block_forward.1} parent=31 // pred_region
        %p181 = scmp.lt.s32.totalorder %s11, 1
        %s182 = scalar_select %p181, %s11, 1
        %s183 = smul.addr %s182, 16
        %s184 = smul.addr %s183, 8
        %s185 = scalar_lea.vmem %s0, %s184
      $region36: #{down_block_forward.1} parent=31 // pred_fallthru
        _
    $region32: #{down_block_forward.1} parent=5 // pred_fallthru
      _
    %p186 = scmp.le.s32.totalorder 1, %s11
    %p187 = scmp.lt.s32.totalorder %s11, 3
    %p188 = pnand %p186, %p187
    %p189 = pneg %p188
    // Predicated region
    $region37: #{down_block_forward.1} parent=5 // pred_check
      _
    $region38: #{down_block_forward.1} parent=5 // pred_check_branch
      %191 = sbr.rel (%p188) target = $region40
    $region39: #{down_block_forward.1} parent=5 // pred_region
      %s192 = ssub.s32 %s11, 1
      %p193 = scmp.lt.s32.totalorder %s16, 1
      %s194 = scalar_select %p193, %s16, 1
      %s195 = smul.addr %s194, 16
      %s196 = smul.addr %s195, 8
      %s197 = scalar_lea.vmem %s0, %s196
      %p198 = pneg %p37
      %p199 = pneg %p34
      %p200 = pneg %p58
      %p201 = pneg %p55
      %p202 = pneg %p79
      %p203 = pneg %p76
      %p204 = pneg %p100
      %p205 = pneg %p97
      %p206 = pneg %p121
      %p207 = pneg %p118
      %p208 = pneg %p147
      %p209 = pneg %p144
      %p210 = scmp.lt.s32.totalorder %s16, 1
      %s211 = scalar_select %p210, %s16, 1
      %s212 = smul.addr %s211, 8
      %s213 = smul.addr %s212, 8
      %s214 = scalar_lea.vmem %s5, %s213
      %p215 = scmp.lt.s32.totalorder %s16, 1
      %s216 = scalar_select %p215, %s16, 1
      %s217 = smul.addr %s216, 16
      %s218 = smul.addr %s217, 8
      %s219 = scalar_lea.vmem %s0, %s218
      %p220 = scmp.lt.s32.totalorder %s16, 1
      %s221 = scalar_select %p220, %s16, 1
      %s222 = smul.addr %s221, 8
      %s223 = smul.addr %s222, 8
      %s224 = scalar_lea.vmem %s5, %s223
      %v226 = vld [vmem:[%s219] sm:$0xff]
      %v227 = vld [vmem:[%s219 + $0x8] sm:$0xff]
      %v228 = vld [vmem:[%s219 + $0x10] sm:$0xff]
      %v229 = vld [vmem:[%s219 + $0x18] sm:$0xff]
      %v230 = vld [vmem:[%s219 + $0x20] sm:$0xff]
      %v231 = vld [vmem:[%s219 + $0x28] sm:$0xff]
      %v232 = vld [vmem:[%s219 + $0x30] sm:$0xff]
      %v233 = vld [vmem:[%s219 + $0x38] sm:$0xff]
      %v234 = vld [vmem:[%s219 + $0x40] sm:$0xff]
      %v235 = vld [vmem:[%s219 + $0x48] sm:$0xff]
      %v236 = vld [vmem:[%s219 + $0x50] sm:$0xff]
      %v237 = vld [vmem:[%s219 + $0x58] sm:$0xff]
      %v238 = vld [vmem:[%s219 + $0x60] sm:$0xff]
      %v239 = vld [vmem:[%s219 + $0x68] sm:$0xff]
      %v240 = vld [vmem:[%s219 + $0x70] sm:$0xff]
      %v241 = vld [vmem:[%s219 + $0x78] sm:$0xff]
      %v242 = vmax.f32 %v226, %v227
      %v243 = vmax.f32 %v228, %v229
      %v244 = vmax.f32 %v230, %v231
      %v245 = vmax.f32 %v232, %v233
      %v246 = vmax.f32 %v234, %v235
      %v247 = vmax.f32 %v236, %v237
      %v248 = vmax.f32 %v238, %v239
      %v249 = vmax.f32 %v240, %v241
      %258 = vrot.lane.b32.xlu0 %v242, 124
      %v259 = vpop.permute.xlu0 %258
      %260 = vrot.lane.b32.xlu0 %v243, 124
      %v261 = vpop.permute.xlu0 %260
      %262 = vrot.lane.b32.xlu0 %v244, 124
      %v263 = vpop.permute.xlu0 %262
      %264 = vrot.lane.b32.xlu0 %v245, 124
      %v265 = vpop.permute.xlu0 %264
      %266 = vrot.lane.b32.xlu0 %v246, 124
      %v267 = vpop.permute.xlu0 %266
      %268 = vrot.lane.b32.xlu0 %v247, 124
      %v269 = vpop.permute.xlu0 %268
      %270 = vrot.lane.b32.xlu0 %v248, 124
      %v271 = vpop.permute.xlu0 %270
      %272 = vrot.lane.b32.xlu0 %v249, 124
      %v273 = vpop.permute.xlu0 %272
      %v282 = vmax.f32 %v242, %v259
      %v283 = vmax.f32 %v243, %v261
      %v284 = vmax.f32 %v244, %v263
      %v285 = vmax.f32 %v245, %v265
      %v286 = vmax.f32 %v246, %v267
      %v287 = vmax.f32 %v247, %v269
      %v288 = vmax.f32 %v248, %v271
      %v289 = vmax.f32 %v249, %v273
      %v290 = vpack.c.bf16 %v282, %v282
      %v291 = vpack.c.bf16 %v283, %v283
      %v292 = vpack.c.bf16 %v284, %v284
      %v293 = vpack.c.bf16 %v285, %v285
      %v294 = vpack.c.bf16 %v286, %v286
      %v295 = vpack.c.bf16 %v287, %v287
      %v296 = vpack.c.bf16 %v288, %v288
      %v297 = vpack.c.bf16 %v289, %v289
      %v299 = vshrl.u32 %v290, 16
      %v301 = vrot.slane %v299, 7
      %v302 = vshll.u32 %v290, 16
      %v304 = vor.u32 %v301, %v302
      %v306 = vshrl.u32 %v291, 16
      %v308 = vrot.slane %v306, 7
      %v309 = vshll.u32 %v291, 16
      %v311 = vor.u32 %v308, %v309
      %v313 = vshrl.u32 %v292, 16
      %v315 = vrot.slane %v313, 7
      %v316 = vshll.u32 %v292, 16
      %v318 = vor.u32 %v315, %v316
      %v320 = vshrl.u32 %v293, 16
      %v322 = vrot.slane %v320, 7
      %v323 = vshll.u32 %v293, 16
      %v325 = vor.u32 %v322, %v323
      %v327 = vshrl.u32 %v294, 16
      %v329 = vrot.slane %v327, 7
      %v330 = vshll.u32 %v294, 16
      %v332 = vor.u32 %v329, %v330
      %v334 = vshrl.u32 %v295, 16
      %v336 = vrot.slane %v334, 7
      %v337 = vshll.u32 %v295, 16
      %v339 = vor.u32 %v336, %v337
      %v341 = vshrl.u32 %v296, 16
      %v343 = vrot.slane %v341, 7
      %v344 = vshll.u32 %v296, 16
      %v346 = vor.u32 %v343, %v344
      %v348 = vshrl.u32 %v297, 16
      %v350 = vrot.slane %v348, 7
      %v351 = vshll.u32 %v297, 16
      %v353 = vor.u32 %v350, %v351
      %vm362 = vcmask 1040384
      %vm363 = vsmask.f32 256
      %vm364 = vmand %vm362, %vm363
      %v365 = vsel %vm364, 0, %v304
      %v366 = vsel %vm364, 0, %v311
      %v367 = vsel %vm364, 0, %v318
      %v368 = vsel %vm364, 0, %v325
      %v369 = vsel %vm364, 0, %v332
      %v370 = vsel %vm364, 0, %v339
      %v371 = vsel %vm364, 0, %v346
      %v372 = vsel %vm364, 0, %v353
      %v373 = vrot.slane %v302, 1
      %v374 = vor.u32 %v299, %v373
      %v375 = vrot.slane %v309, 1
      %v376 = vor.u32 %v306, %v375
      %v377 = vrot.slane %v316, 1
      %v378 = vor.u32 %v313, %v377
      %v379 = vrot.slane %v323, 1
      %v380 = vor.u32 %v320, %v379
      %v381 = vrot.slane %v330, 1
      %v382 = vor.u32 %v327, %v381
      %v383 = vrot.slane %v337, 1
      %v384 = vor.u32 %v334, %v383
      %v385 = vrot.slane %v344, 1
      %v386 = vor.u32 %v341, %v385
      %v387 = vrot.slane %v351, 1
      %v388 = vor.u32 %v348, %v387
      %vm397 = vcmask 1043456
      %vm398 = vsmask.f32 3328
      %vm399 = vmand %vm397, %vm398
      %v400 = vsel %vm399, %v374, 0
      %v401 = vsel %vm399, %v376, 0
      %v402 = vsel %vm399, %v378, 0
      %v403 = vsel %vm399, %v380, 0
      %v404 = vsel %vm399, %v382, 0
      %v405 = vsel %vm399, %v384, 0
      %v406 = vsel %vm399, %v386, 0
      %v407 = vsel %vm399, %v388, 0
      %416 = vrot.lane.b32.xlu0 %v290, 4
      %v417 = vpop.permute.xlu0 %416
      %418 = vrot.lane.b32.xlu0 %v291, 4
      %v419 = vpop.permute.xlu0 %418
      %420 = vrot.lane.b32.xlu0 %v292, 4
      %v421 = vpop.permute.xlu0 %420
      %422 = vrot.lane.b32.xlu0 %v293, 4
      %v423 = vpop.permute.xlu0 %422
      %424 = vrot.lane.b32.xlu0 %v294, 4
      %v425 = vpop.permute.xlu0 %424
      %426 = vrot.lane.b32.xlu0 %v295, 4
      %v427 = vpop.permute.xlu0 %426
      %428 = vrot.lane.b32.xlu0 %v296, 4
      %v429 = vpop.permute.xlu0 %428
      %430 = vrot.lane.b32.xlu0 %v297, 4
      %v431 = vpop.permute.xlu0 %430
      %440 = vrot.lane.b32.xlu0 %v400, 8
      %v441 = vpop.permute.xlu0 %440
      %442 = vrot.lane.b32.xlu0 %v401, 8
      %v443 = vpop.permute.xlu0 %442
      %444 = vrot.lane.b32.xlu0 %v402, 8
      %v445 = vpop.permute.xlu0 %444
      %446 = vrot.lane.b32.xlu0 %v403, 8
      %v447 = vpop.permute.xlu0 %446
      %448 = vrot.lane.b32.xlu0 %v404, 8
      %v449 = vpop.permute.xlu0 %448
      %450 = vrot.lane.b32.xlu0 %v405, 8
      %v451 = vpop.permute.xlu0 %450
      %452 = vrot.lane.b32.xlu0 %v406, 8
      %v453 = vpop.permute.xlu0 %452
      %454 = vrot.lane.b32.xlu0 %v407, 8
      %v455 = vpop.permute.xlu0 %454
      %vm456 = vcmask 31744
      %v459 = vsel %vm456, %v365, %v417
      %v462 = vsel %vm456, %v366, %v419
      %v465 = vsel %vm456, %v367, %v421
      %v468 = vsel %vm456, %v368, %v423
      %v471 = vsel %vm456, %v369, %v425
      %v474 = vsel %vm456, %v370, %v427
      %v477 = vsel %vm456, %v371, %v429
      %v480 = vsel %vm456, %v372, %v431
      %vm481 = vcmask 64512
      %v483 = vsel %vm481, %v459, %v441
      %v486 = vsel %vm481, %v462, %v443
      %v489 = vsel %vm481, %v465, %v445
      %v492 = vsel %vm481, %v468, %v447
      %v495 = vsel %vm481, %v471, %v449
      %v498 = vsel %vm481, %v474, %v451
      %v501 = vsel %vm481, %v477, %v453
      %v504 = vsel %vm481, %v480, %v455
      %s506 = scalar_lea.vmem [#allocation2], 4
      %vm507 = vcmask 93184
      %508 = vst.msk [vmem:[%s506] sm:$0xf] %vm507, %v483
      %509 = vst.msk [vmem:[%s506 + $0x4] sm:$0xf] %vm507, %v486
      %510 = vst.msk [vmem:[%s506 + $0x8] sm:$0xf] %vm507, %v489
      %511 = vst.msk [vmem:[%s506 + $0xc] sm:$0xf] %vm507, %v492
      %512 = vst.msk [vmem:[%s506 + $0x10] sm:$0xf] %vm507, %v495
      %513 = vst.msk [vmem:[%s506 + $0x14] sm:$0xf] %vm507, %v498
      %514 = vst.msk [vmem:[%s506 + $0x18] sm:$0xf] %vm507, %v501
      %515 = vst.msk [vmem:[%s506 + $0x1c] sm:$0xf] %vm507, %v504
      %516 = vst.msk [vmem:[#allocation2] sm:$0xf] %vm507, 0
      %s517 = scalar_lea.vmem [#allocation2], 36
      %518 = vst.msk [vmem:[%s517] sm:$0xf] %vm507, 0
      %v519 = vld [vmem:[#allocation2] sm:$0xf]
      %v520 = vld [vmem:[#allocation2 + $0x4] sm:$0xf]
      %v521 = vld [vmem:[#allocation2 + $0x8] sm:$0xf]
      %v522 = vld [vmem:[#allocation2 + $0xc] sm:$0xf]
      %v523 = vld [vmem:[#allocation2 + $0x10] sm:$0xf]
      %v524 = vld [vmem:[#allocation2 + $0x14] sm:$0xf]
      %v525 = vld [vmem:[#allocation2 + $0x18] sm:$0xf]
      %v526 = vld [vmem:[#allocation2 + $0x1c] sm:$0xf]
      %v527 = vld [vmem:[%s1] sm:$0xf]
      %v528 = vld [vmem:[%s1 + $0x4] sm:$0x3]
      %v529 = vld [vmem:[%s506] sm:$0xf]
      %v530 = vld [vmem:[%s506 + $0x4] sm:$0xf]
      %v531 = vld [vmem:[%s506 + $0x8] sm:$0xf]
      %v532 = vld [vmem:[%s506 + $0xc] sm:$0xf]
      %v533 = vld [vmem:[%s506 + $0x10] sm:$0xf]
      %v534 = vld [vmem:[%s506 + $0x14] sm:$0xf]
      %v535 = vld [vmem:[%s506 + $0x18] sm:$0xf]
      %v536 = vld [vmem:[%s506 + $0x1c] sm:$0xf]
      %s537 = scalar_lea.vmem %s1, 8
      %v538 = vld [vmem:[%s537] sm:$0xf]
      %v539 = vld [vmem:[%s537 + $0x4] sm:$0x3]
      %v548 = vunpack.c.l.b16 %v529
      %v549 = vunpack.c.l.b16 %v530
      %v550 = vunpack.c.l.b16 %v531
      %v551 = vunpack.c.l.b16 %v532
      %v552 = vunpack.c.l.b16 %v533
      %v553 = vunpack.c.l.b16 %v534
      %v554 = vunpack.c.l.b16 %v535
      %v555 = vunpack.c.l.b16 %v536
      %v556 = vpack.c.b16 %v549, %v548
      %v557 = vpack.c.b16 %v551, %v550
      %v558 = vpack.c.b16 %v553, %v552
      %v559 = vpack.c.b16 %v555, %v554
      %v562 = vunpack.c.l.b16 %v538
      %v563 = vunpack.c.l.b16 %v539
      %v564 = vpack.c.b16 %v563, %v562
      %vm565 = vcmask 97280
      %v567 = vsel %vm565, %v556, 0
      %v570 = vsel %vm565, %v557, 0
      %v573 = vsel %vm565, %v558, 0
      %v576 = vsel %vm565, %v559, 0
      %vm578 = vcmask 1045504
      %v580 = vsel %vm578, %v564, 0
      %582 = vmatprep.subr.bf16.mxu0 0
      %583 = vmatpush1.bf16.msra.mxu0 0
      %584 = vmatprep.subr.bf16.mxu0 0
      %585 = vmatpush1.bf16.msra.mxu0 0
      %586 = vmatprep.subr.bf16.mxu0 0
      %587 = vmatpush1.bf16.msra.mxu0 0
      %588 = vmatprep.subr.bf16.mxu0 0
      %589 = vmatpush1.bf16.msra.mxu0 0
      %590 = vmatprep.subr.bf16.mxu0 0
      %591 = vmatpush1.bf16.msra.mxu0 0
      %592 = vmatprep.subr.bf16.mxu0 0
      %593 = vmatpush1.bf16.msra.mxu0 0
      %594 = vmatprep.subr.bf16.mxu0 0
      %595 = vmatpush1.bf16.msra.mxu0 0
      %596 = vmatprep.subr.bf16.mxu0 0
      %597 = vmatpush1.bf16.msra.mxu0 %v580
      %598 = vmatprep.subr.bf16.mxu0 0
      %599 = vmatpush2.bf16.msra.mxu0 0
      %600 = vmatprep.subr.bf16.mxu0 0
      %601 = vmatpush2.bf16.msra.mxu0 0
      %602 = vmatprep.subr.bf16.mxu0 0
      %603 = vmatpush2.bf16.msra.mxu0 0
      %604 = vmatprep.subr.bf16.mxu0 0
      %605 = vmatpush2.bf16.msra.mxu0 0
      %606 = vmatprep.subr.bf16.mxu0 0
      %607 = vmatpush2.bf16.msra.mxu0 0
      %608 = vmatprep.subr.bf16.mxu0 0
      %609 = vmatpush2.bf16.msra.mxu0 0
      %610 = vmatprep.subr.bf16.mxu0 0
      %611 = vmatpush2.bf16.msra.mxu0 0
      %612 = vmatprep.subr.bf16.mxu0 0
      %613 = vmatpush2.bf16.msra.mxu0 0
      %614 = vmatprep.mubr.bf16.mxu0 0
      %615 = vmatmul.mubr.bf16.gmra.mxu0 %v567
      %v616 = vpop.f32.mrf.mxu0
      %v617 = vadd.f32 0.0, %v616
      %v618 = vpop.f32.mrf.mxu0
      %v619 = vpop.f32.mrf.mxu0
      %v620 = vadd.f32 0.0, %v619
      %v621 = vpop.f32.mrf.mxu0
      %622 = vmatprep.mubr.bf16.mxu0 0
      %623 = vmatmul.mubr.bf16.gmra.mxu0 %v570
      %v624 = vpop.f32.mrf.mxu0
      %v625 = vadd.f32 0.0, %v624
      %v626 = vpop.f32.mrf.mxu0
      %v627 = vpop.f32.mrf.mxu0
      %v628 = vadd.f32 0.0, %v627
      %v629 = vpop.f32.mrf.mxu0
      %630 = vmatprep.mubr.bf16.mxu0 0
      %631 = vmatmul.mubr.bf16.gmra.mxu0 %v573
      %v632 = vpop.f32.mrf.mxu0
      %v633 = vadd.f32 0.0, %v632
      %v634 = vpop.f32.mrf.mxu0
      %v635 = vpop.f32.mrf.mxu0
      %v636 = vadd.f32 0.0, %v635
      %v637 = vpop.f32.mrf.mxu0
      %638 = vmatprep.mubr.bf16.mxu0 0
      %639 = vmatmul.mubr.bf16.gmra.mxu0 %v576
      %v640 = vpop.f32.mrf.mxu0
      %v641 = vadd.f32 0.0, %v640
      %v642 = vpop.f32.mrf.mxu0
      %v643 = vpop.f32.mrf.mxu0
      %v644 = vadd.f32 0.0, %v643
      %v645 = vpop.f32.mrf.mxu0
      %646 = vdwg.mxu0
      %v655 = vunpack.c.l.b16 %v519
      %v656 = vunpack.c.l.b16 %v520
      %v657 = vunpack.c.l.b16 %v521
      %v658 = vunpack.c.l.b16 %v522
      %v659 = vunpack.c.l.b16 %v523
      %v660 = vunpack.c.l.b16 %v524
      %v661 = vunpack.c.l.b16 %v525
      %v662 = vunpack.c.l.b16 %v526
      %v663 = vpack.c.b16 %v656, %v655
      %v664 = vpack.c.b16 %v658, %v657
      %v665 = vpack.c.b16 %v660, %v659
      %v666 = vpack.c.b16 %v662, %v661
      %v669 = vunpack.c.l.b16 %v527
      %v670 = vunpack.c.l.b16 %v528
      %v671 = vpack.c.b16 %v670, %v669
      %v673 = vsel %vm565, %v663, 0
      %v676 = vsel %vm565, %v664, 0
      %v679 = vsel %vm565, %v665, 0
      %v682 = vsel %vm565, %v666, 0
      %v685 = vsel %vm578, %v671, 0
      %687 = vmatprep.subr.bf16.mxu0 0
      %688 = vmatpush1.bf16.msra.mxu0 0
      %689 = vmatprep.subr.bf16.mxu0 0
      %690 = vmatpush1.bf16.msra.mxu0 0
      %691 = vmatprep.subr.bf16.mxu0 0
      %692 = vmatpush1.bf16.msra.mxu0 0
      %693 = vmatprep.subr.bf16.mxu0 0
      %694 = vmatpush1.bf16.msra.mxu0 0
      %695 = vmatprep.subr.bf16.mxu0 0
      %696 = vmatpush1.bf16.msra.mxu0 0
      %697 = vmatprep.subr.bf16.mxu0 0
      %698 = vmatpush1.bf16.msra.mxu0 0
      %699 = vmatprep.subr.bf16.mxu0 0
      %700 = vmatpush1.bf16.msra.mxu0 0
      %701 = vmatprep.subr.bf16.mxu0 0
      %702 = vmatpush1.bf16.msra.mxu0 %v685
      %703 = vmatprep.subr.bf16.mxu0 0
      %704 = vmatpush2.bf16.msra.mxu0 0
      %705 = vmatprep.subr.bf16.mxu0 0
      %706 = vmatpush2.bf16.msra.mxu0 0
      %707 = vmatprep.subr.bf16.mxu0 0
      %708 = vmatpush2.bf16.msra.mxu0 0
      %709 = vmatprep.subr.bf16.mxu0 0
      %710 = vmatpush2.bf16.msra.mxu0 0
      %711 = vmatprep.subr.bf16.mxu0 0
      %712 = vmatpush2.bf16.msra.mxu0 0
      %713 = vmatprep.subr.bf16.mxu0 0
      %714 = vmatpush2.bf16.msra.mxu0 0
      %715 = vmatprep.subr.bf16.mxu0 0
      %716 = vmatpush2.bf16.msra.mxu0 0
      %717 = vmatprep.subr.bf16.mxu0 0
      %718 = vmatpush2.bf16.msra.mxu0 0
      %719 = vmatprep.mubr.bf16.mxu0 0
      %720 = vmatmul.mubr.bf16.gmra.mxu0 %v673
      %v721 = vpop.f32.mrf.mxu0
      %v722 = vadd.f32 %v617, %v721
      %v723 = vpop.f32.mrf.mxu0
      %v724 = vpop.f32.mrf.mxu0
      %v725 = vadd.f32 %v620, %v724
      %v726 = vpop.f32.mrf.mxu0
      %727 = vmatprep.mubr.bf16.mxu0 0
      %728 = vmatmul.mubr.bf16.gmra.mxu0 %v676
      %v729 = vpop.f32.mrf.mxu0
      %v730 = vadd.f32 %v625, %v729
      %v731 = vpop.f32.mrf.mxu0
      %v732 = vpop.f32.mrf.mxu0
      %v733 = vadd.f32 %v628, %v732
      %v734 = vpop.f32.mrf.mxu0
      %735 = vmatprep.mubr.bf16.mxu0 0
      %736 = vmatmul.mubr.bf16.gmra.mxu0 %v679
      %v737 = vpop.f32.mrf.mxu0
      %v738 = vadd.f32 %v633, %v737
      %v739 = vpop.f32.mrf.mxu0
      %v740 = vpop.f32.mrf.mxu0
      %v741 = vadd.f32 %v636, %v740
      %v742 = vpop.f32.mrf.mxu0
      %743 = vmatprep.mubr.bf16.mxu0 0
      %744 = vmatmul.mubr.bf16.gmra.mxu0 %v682
      %v745 = vpop.f32.mrf.mxu0
      %v746 = vadd.f32 %v641, %v745
      %v747 = vpop.f32.mrf.mxu0
      %v748 = vpop.f32.mrf.mxu0
      %v749 = vadd.f32 %v644, %v748
      %v750 = vpop.f32.mrf.mxu0
      %751 = vdwg.mxu0
      %s752 = scalar_lea.vmem [#allocation2], 8
      %v753 = vld [vmem:[%s752] sm:$0xf]
      %v754 = vld [vmem:[%s752 + $0x4] sm:$0xf]
      %v755 = vld [vmem:[%s752 + $0x8] sm:$0xf]
      %v756 = vld [vmem:[%s752 + $0xc] sm:$0xf]
      %v757 = vld [vmem:[%s752 + $0x10] sm:$0xf]
      %v758 = vld [vmem:[%s752 + $0x14] sm:$0xf]
      %v759 = vld [vmem:[%s752 + $0x18] sm:$0xf]
      %v760 = vld [vmem:[%s752 + $0x1c] sm:$0xf]
      %s761 = scalar_lea.vmem %s1, 16
      %v762 = vld [vmem:[%s761] sm:$0xf]
      %v763 = vld [vmem:[%s761 + $0x4] sm:$0x3]
      %v772 = vunpack.c.l.b16 %v753
      %v773 = vunpack.c.l.b16 %v754
      %v774 = vunpack.c.l.b16 %v755
      %v775 = vunpack.c.l.b16 %v756
      %v776 = vunpack.c.l.b16 %v757
      %v777 = vunpack.c.l.b16 %v758
      %v778 = vunpack.c.l.b16 %v759
      %v779 = vunpack.c.l.b16 %v760
      %v780 = vpack.c.b16 %v773, %v772
      %v781 = vpack.c.b16 %v775, %v774
      %v782 = vpack.c.b16 %v777, %v776
      %v783 = vpack.c.b16 %v779, %v778
      %v786 = vunpack.c.l.b16 %v762
      %v787 = vunpack.c.l.b16 %v763
      %v788 = vpack.c.b16 %v787, %v786
      %v790 = vsel %vm565, %v780, 0
      %v793 = vsel %vm565, %v781, 0
      %v796 = vsel %vm565, %v782, 0
      %v799 = vsel %vm565, %v783, 0
      %v802 = vsel %vm578, %v788, 0
      %804 = vmatprep.subr.bf16.mxu0 0
      %805 = vmatpush1.bf16.msra.mxu0 0
      %806 = vmatprep.subr.bf16.mxu0 0
      %807 = vmatpush1.bf16.msra.mxu0 0
      %808 = vmatprep.subr.bf16.mxu0 0
      %809 = vmatpush1.bf16.msra.mxu0 0
      %810 = vmatprep.subr.bf16.mxu0 0
      %811 = vmatpush1.bf16.msra.mxu0 0
      %812 = vmatprep.subr.bf16.mxu0 0
      %813 = vmatpush1.bf16.msra.mxu0 0
      %814 = vmatprep.subr.bf16.mxu0 0
      %815 = vmatpush1.bf16.msra.mxu0 0
      %816 = vmatprep.subr.bf16.mxu0 0
      %817 = vmatpush1.bf16.msra.mxu0 0
      %818 = vmatprep.subr.bf16.mxu0 0
      %819 = vmatpush1.bf16.msra.mxu0 %v802
      %820 = vmatprep.subr.bf16.mxu0 0
      %821 = vmatpush2.bf16.msra.mxu0 0
      %822 = vmatprep.subr.bf16.mxu0 0
      %823 = vmatpush2.bf16.msra.mxu0 0
      %824 = vmatprep.subr.bf16.mxu0 0
      %825 = vmatpush2.bf16.msra.mxu0 0
      %826 = vmatprep.subr.bf16.mxu0 0
      %827 = vmatpush2.bf16.msra.mxu0 0
      %828 = vmatprep.subr.bf16.mxu0 0
      %829 = vmatpush2.bf16.msra.mxu0 0
      %830 = vmatprep.subr.bf16.mxu0 0
      %831 = vmatpush2.bf16.msra.mxu0 0
      %832 = vmatprep.subr.bf16.mxu0 0
      %833 = vmatpush2.bf16.msra.mxu0 0
      %834 = vmatprep.subr.bf16.mxu0 0
      %835 = vmatpush2.bf16.msra.mxu0 0
      %836 = vmatprep.mubr.bf16.mxu0 0
      %837 = vmatmul.mubr.bf16.gmra.mxu0 %v790
      %v838 = vpop.f32.mrf.mxu0
      %v839 = vadd.f32 0.0, %v838
      %v840 = vpop.f32.mrf.mxu0
      %v841 = vpop.f32.mrf.mxu0
      %v842 = vadd.f32 0.0, %v841
      %v843 = vpop.f32.mrf.mxu0
      %844 = vmatprep.mubr.bf16.mxu0 0
      %845 = vmatmul.mubr.bf16.gmra.mxu0 %v793
      %v846 = vpop.f32.mrf.mxu0
      %v847 = vadd.f32 0.0, %v846
      %v848 = vpop.f32.mrf.mxu0
      %v849 = vpop.f32.mrf.mxu0
      %v850 = vadd.f32 0.0, %v849
      %v851 = vpop.f32.mrf.mxu0
      %852 = vmatprep.mubr.bf16.mxu0 0
      %853 = vmatmul.mubr.bf16.gmra.mxu0 %v796
      %v854 = vpop.f32.mrf.mxu0
      %v855 = vadd.f32 0.0, %v854
      %v856 = vpop.f32.mrf.mxu0
      %v857 = vpop.f32.mrf.mxu0
      %v858 = vadd.f32 0.0, %v857
      %v859 = vpop.f32.mrf.mxu0
      %860 = vmatprep.mubr.bf16.mxu0 0
      %861 = vmatmul.mubr.bf16.gmra.mxu0 %v799
      %v862 = vpop.f32.mrf.mxu0
      %v863 = vadd.f32 0.0, %v862
      %v864 = vpop.f32.mrf.mxu0
      %v865 = vpop.f32.mrf.mxu0
      %v866 = vadd.f32 0.0, %v865
      %v867 = vpop.f32.mrf.mxu0
      %868 = vdwg.mxu0
      %v869 = vadd.f32 %v722, %v839
      %v870 = vadd.f32 %v725, %v842
      %v871 = vadd.f32 %v730, %v847
      %v872 = vadd.f32 %v733, %v850
      %v873 = vadd.f32 %v738, %v855
      %v874 = vadd.f32 %v741, %v858
      %v875 = vadd.f32 %v746, %v863
      %v876 = vadd.f32 %v749, %v866
      %v877 = vld [vmem:[%s3] sm:$0x1]
      %v879 = vlaneseq
      %v880 = vshrl.u32 %v879, 7
      %v881 = vsub.s32 0, %v880
      %v882 = vrot.slane %v877, %v881
      %v884 = vadd.f32 %v869, %v882
      %v885 = vadd.f32 %v870, %v882
      %v886 = vadd.f32 %v871, %v882
      %v887 = vadd.f32 %v872, %v882
      %v888 = vadd.f32 %v873, %v882
      %v889 = vadd.f32 %v874, %v882
      %v890 = vadd.f32 %v875, %v882
      %v891 = vadd.f32 %v876, %v882
      %vm892 = vcmp.gt.f32.partialorder %v884, 0.0
      %vm893 = vcmp.gt.f32.partialorder %v885, 0.0
      %vm894 = vcmp.gt.f32.partialorder %v886, 0.0
      %vm895 = vcmp.gt.f32.partialorder %v887, 0.0
      %vm896 = vcmp.gt.f32.partialorder %v888, 0.0
      %vm897 = vcmp.gt.f32.partialorder %v889, 0.0
      %vm898 = vcmp.gt.f32.partialorder %v890, 0.0
      %vm899 = vcmp.gt.f32.partialorder %v891, 0.0
      %v900 = vmul.f32 %v884, 0.01
      %v901 = vmul.f32 %v885, 0.01
      %v902 = vmul.f32 %v886, 0.01
      %v903 = vmul.f32 %v887, 0.01
      %v904 = vmul.f32 %v888, 0.01
      %v905 = vmul.f32 %v889, 0.01
      %v906 = vmul.f32 %v890, 0.01
      %v907 = vmul.f32 %v891, 0.01
      %v908 = vsel %vm892, %v884, %v900
      %v909 = vsel %vm893, %v885, %v901
      %v910 = vsel %vm894, %v886, %v902
      %v911 = vsel %vm895, %v887, %v903
      %v912 = vsel %vm896, %v888, %v904
      %v913 = vsel %vm897, %v889, %v905
      %v914 = vsel %vm898, %v890, %v906
      %v915 = vsel %vm899, %v891, %v907
      %v916 = vpack.c.bf16 %v908, %v908
      %v917 = vpack.c.bf16 %v909, %v909
      %v918 = vpack.c.bf16 %v910, %v910
      %v919 = vpack.c.bf16 %v911, %v911
      %v920 = vpack.c.bf16 %v912, %v912
      %v921 = vpack.c.bf16 %v913, %v913
      %v922 = vpack.c.bf16 %v914, %v914
      %v923 = vpack.c.bf16 %v915, %v915
      %v925 = vshrl.u32 %v916, 16
      %v927 = vrot.slane %v925, 7
      %v928 = vshll.u32 %v916, 16
      %v930 = vor.u32 %v927, %v928
      %v932 = vshrl.u32 %v917, 16
      %v934 = vrot.slane %v932, 7
      %v935 = vshll.u32 %v917, 16
      %v937 = vor.u32 %v934, %v935
      %v939 = vshrl.u32 %v918, 16
      %v941 = vrot.slane %v939, 7
      %v942 = vshll.u32 %v918, 16
      %v944 = vor.u32 %v941, %v942
      %v946 = vshrl.u32 %v919, 16
      %v948 = vrot.slane %v946, 7
      %v949 = vshll.u32 %v919, 16
      %v951 = vor.u32 %v948, %v949
      %v953 = vshrl.u32 %v920, 16
      %v955 = vrot.slane %v953, 7
      %v956 = vshll.u32 %v920, 16
      %v958 = vor.u32 %v955, %v956
      %v960 = vshrl.u32 %v921, 16
      %v962 = vrot.slane %v960, 7
      %v963 = vshll.u32 %v921, 16
      %v965 = vor.u32 %v962, %v963
      %v967 = vshrl.u32 %v922, 16
      %v969 = vrot.slane %v967, 7
      %v970 = vshll.u32 %v922, 16
      %v972 = vor.u32 %v969, %v970
      %v974 = vshrl.u32 %v923, 16
      %v976 = vrot.slane %v974, 7
      %v977 = vshll.u32 %v923, 16
      %v979 = vor.u32 %v976, %v977
      %v988 = vsel %vm364, 0, %v930
      %v989 = vsel %vm364, 0, %v937
      %v990 = vsel %vm364, 0, %v944
      %v991 = vsel %vm364, 0, %v951
      %v992 = vsel %vm364, 0, %v958
      %v993 = vsel %vm364, 0, %v965
      %v994 = vsel %vm364, 0, %v972
      %v995 = vsel %vm364, 0, %v979
      %v996 = vrot.slane %v928, 1
      %v997 = vor.u32 %v925, %v996
      %v998 = vrot.slane %v935, 1
      %v999 = vor.u32 %v932, %v998
      %v1000 = vrot.slane %v942, 1
      %v1001 = vor.u32 %v939, %v1000
      %v1002 = vrot.slane %v949, 1
      %v1003 = vor.u32 %v946, %v1002
      %v1004 = vrot.slane %v956, 1
      %v1005 = vor.u32 %v953, %v1004
      %v1006 = vrot.slane %v963, 1
      %v1007 = vor.u32 %v960, %v1006
      %v1008 = vrot.slane %v970, 1
      %v1009 = vor.u32 %v967, %v1008
      %v1010 = vrot.slane %v977, 1
      %v1011 = vor.u32 %v974, %v1010
      %v1020 = vsel %vm399, %v997, 0
      %v1021 = vsel %vm399, %v999, 0
      %v1022 = vsel %vm399, %v1001, 0
      %v1023 = vsel %vm399, %v1003, 0
      %v1024 = vsel %vm399, %v1005, 0
      %v1025 = vsel %vm399, %v1007, 0
      %v1026 = vsel %vm399, %v1009, 0
      %v1027 = vsel %vm399, %v1011, 0
      %v1052 = vunpack.c.l.b16 %v988
      %v1053 = vunpack.c.l.b16 %v916
      %v1054 = vunpack.c.l.b16 %v1020
      %v1055 = vunpack.c.l.b16 %v989
      %v1056 = vunpack.c.l.b16 %v917
      %v1057 = vunpack.c.l.b16 %v1021
      %v1058 = vunpack.c.l.b16 %v990
      %v1059 = vunpack.c.l.b16 %v918
      %v1060 = vunpack.c.l.b16 %v1022
      %v1061 = vunpack.c.l.b16 %v991
      %v1062 = vunpack.c.l.b16 %v919
      %v1063 = vunpack.c.l.b16 %v1023
      %v1064 = vunpack.c.l.b16 %v992
      %v1065 = vunpack.c.l.b16 %v920
      %v1066 = vunpack.c.l.b16 %v1024
      %v1067 = vunpack.c.l.b16 %v993
      %v1068 = vunpack.c.l.b16 %v921
      %v1069 = vunpack.c.l.b16 %v1025
      %v1070 = vunpack.c.l.b16 %v994
      %v1071 = vunpack.c.l.b16 %v922
      %v1072 = vunpack.c.l.b16 %v1026
      %v1073 = vunpack.c.l.b16 %v995
      %v1074 = vunpack.c.l.b16 %v923
      %v1075 = vunpack.c.l.b16 %v1027
      %v1076 = vpack.c.b16 %v1053, %v1052
      %v1077 = vpack.c.b16 %v1054, %v1054
      %v1078 = vpack.c.b16 %v1056, %v1055
      %v1079 = vpack.c.b16 %v1057, %v1057
      %v1080 = vpack.c.b16 %v1059, %v1058
      %v1081 = vpack.c.b16 %v1060, %v1060
      %v1082 = vpack.c.b16 %v1062, %v1061
      %v1083 = vpack.c.b16 %v1063, %v1063
      %v1084 = vpack.c.b16 %v1065, %v1064
      %v1085 = vpack.c.b16 %v1066, %v1066
      %v1086 = vpack.c.b16 %v1068, %v1067
      %v1087 = vpack.c.b16 %v1069, %v1069
      %v1088 = vpack.c.b16 %v1071, %v1070
      %v1089 = vpack.c.b16 %v1072, %v1072
      %v1090 = vpack.c.b16 %v1074, %v1073
      %v1091 = vpack.c.b16 %v1075, %v1075
      %s1108 = scalar_lea.vmem [#allocation3], 12
      %1109 = vst [vmem:[%s1108] sm:$0xff] %v1076
      %1110 = vst [vmem:[%s1108 + $0x8] sm:$0xf] %v1077
      %1111 = vst [vmem:[%s1108 + $0xc] sm:$0xff] %v1078
      %1112 = vst [vmem:[%s1108 + $0x14] sm:$0xf] %v1079
      %1113 = vst [vmem:[%s1108 + $0x18] sm:$0xff] %v1080
      %1114 = vst [vmem:[%s1108 + $0x20] sm:$0xf] %v1081
      %1115 = vst [vmem:[%s1108 + $0x24] sm:$0xff] %v1082
      %1116 = vst [vmem:[%s1108 + $0x2c] sm:$0xf] %v1083
      %1117 = vst [vmem:[%s1108 + $0x30] sm:$0xff] %v1084
      %1118 = vst [vmem:[%s1108 + $0x38] sm:$0xf] %v1085
      %1119 = vst [vmem:[%s1108 + $0x3c] sm:$0xff] %v1086
      %1120 = vst [vmem:[%s1108 + $0x44] sm:$0xf] %v1087
      %1121 = vst [vmem:[%s1108 + $0x48] sm:$0xff] %v1088
      %1122 = vst [vmem:[%s1108 + $0x50] sm:$0xf] %v1089
      %1123 = vst [vmem:[%s1108 + $0x54] sm:$0xff] %v1090
      %1124 = vst [vmem:[%s1108 + $0x5c] sm:$0xf] %v1091
      %1125 = vst [vmem:[#allocation3] sm:$0xff] 0
      %1126 = vst [vmem:[#allocation3 + $0x8] sm:$0xf] 0
      %s1127 = scalar_lea.vmem [#allocation3], 108
      %1128 = vst [vmem:[%s1127] sm:$0xff] 0
      %1129 = vst [vmem:[%s1127 + $0x8] sm:$0xf] 0
      %v1130 = vld [vmem:[#allocation3] sm:$0xff]
      %v1131 = vld [vmem:[#allocation3 + $0x8] sm:$0xf]
      %v1132 = vld [vmem:[#allocation3 + $0xc] sm:$0xff]
      %v1133 = vld [vmem:[#allocation3 + $0x14] sm:$0xf]
      %v1134 = vld [vmem:[#allocation3 + $0x18] sm:$0xff]
      %v1135 = vld [vmem:[#allocation3 + $0x20] sm:$0xf]
      %v1136 = vld [vmem:[#allocation3 + $0x24] sm:$0xff]
      %v1137 = vld [vmem:[#allocation3 + $0x2c] sm:$0xf]
      %v1138 = vld [vmem:[#allocation3 + $0x30] sm:$0xff]
      %v1139 = vld [vmem:[#allocation3 + $0x38] sm:$0xf]
      %v1140 = vld [vmem:[#allocation3 + $0x3c] sm:$0xff]
      %v1141 = vld [vmem:[#allocation3 + $0x44] sm:$0xf]
      %v1142 = vld [vmem:[#allocation3 + $0x48] sm:$0xff]
      %v1143 = vld [vmem:[#allocation3 + $0x50] sm:$0xf]
      %v1144 = vld [vmem:[#allocation3 + $0x54] sm:$0xff]
      %v1145 = vld [vmem:[#allocation3 + $0x5c] sm:$0xf]
      %v1146 = vld [vmem:[%s2] sm:$0xf]
      %v1147 = vld [vmem:[%s2 + $0x4] sm:$0xf]
      %v1148 = vld [vmem:[%s2 + $0x8] sm:$0xf]
      %v1149 = vld [vmem:[%s2 + $0xc] sm:$0xf]
      %v1150 = vld [vmem:[%s2 + $0x10] sm:$0xf]
      %v1151 = vld [vmem:[%s2 + $0x14] sm:$0xf]
      %v1152 = vld [vmem:[%s2 + $0x18] sm:$0xf]
      %v1153 = vld [vmem:[%s2 + $0x1c] sm:$0xf]
      %v1154 = vld [vmem:[%s2 + $0x20] sm:$0xf]
      %v1155 = vld [vmem:[%s2 + $0x24] sm:$0xf]
      %v1156 = vld [vmem:[%s2 + $0x28] sm:$0xf]
      %v1157 = vld [vmem:[%s2 + $0x2c] sm:$0xf]
      %v1158 = vld [vmem:[%s2 + $0x30] sm:$0xf]
      %v1159 = vld [vmem:[%s2 + $0x34] sm:$0xf]
      %v1160 = vld [vmem:[%s2 + $0x38] sm:$0xf]
      %v1161 = vld [vmem:[%s2 + $0x3c] sm:$0xf]
      %v1162 = vld [vmem:[%s2 + $0x40] sm:$0xf]
      %v1163 = vld [vmem:[%s2 + $0x44] sm:$0xf]
      %v1164 = vld [vmem:[%s2 + $0x48] sm:$0xf]
      %v1165 = vld [vmem:[%s2 + $0x4c] sm:$0xf]
      %v1166 = vld [vmem:[%s2 + $0x50] sm:$0xf]
      %v1167 = vld [vmem:[%s2 + $0x54] sm:$0xf]
      %v1168 = vld [vmem:[%s2 + $0x58] sm:$0xf]
      %v1169 = vld [vmem:[%s2 + $0x5c] sm:$0xf]
      %v1170 = vld [vmem:[%s2 + $0x60] sm:$0xf]
      %v1171 = vld [vmem:[%s2 + $0x64] sm:$0xf]
      %v1172 = vld [vmem:[%s2 + $0x68] sm:$0xf]
      %v1173 = vld [vmem:[%s2 + $0x6c] sm:$0xf]
      %v1174 = vld [vmem:[%s2 + $0x70] sm:$0xf]
      %v1175 = vld [vmem:[%s2 + $0x74] sm:$0xf]
      %v1176 = vld [vmem:[%s2 + $0x78] sm:$0xf]
      %v1177 = vld [vmem:[%s2 + $0x7c] sm:$0xf]
      %v1178 = vld [vmem:[%s2 + $0x80] sm:$0xf]
      %v1179 = vld [vmem:[%s2 + $0x84] sm:$0xf]
      %v1180 = vld [vmem:[%s2 + $0x88] sm:$0xf]
      %v1181 = vld [vmem:[%s2 + $0x8c] sm:$0xf]
      %v1182 = vld [vmem:[%s2 + $0x90] sm:$0xf]
      %v1183 = vld [vmem:[%s2 + $0x94] sm:$0xf]
      %v1184 = vld [vmem:[%s2 + $0x98] sm:$0xf]
      %v1185 = vld [vmem:[%s2 + $0x9c] sm:$0xf]
      %v1186 = vld [vmem:[%s2 + $0xa0] sm:$0xf]
      %v1187 = vld [vmem:[%s2 + $0xa4] sm:$0xf]
      %v1188 = vld [vmem:[%s2 + $0xa8] sm:$0xf]
      %v1189 = vld [vmem:[%s2 + $0xac] sm:$0xf]
      %v1190 = vld [vmem:[%s2 + $0xb0] sm:$0xf]
      %v1191 = vld [vmem:[%s2 + $0xb4] sm:$0xf]
      %v1192 = vld [vmem:[%s2 + $0xb8] sm:$0xf]
      %v1193 = vld [vmem:[%s2 + $0xbc] sm:$0xf]
      %v1194 = vld [vmem:[%s1108] sm:$0xff]
      %v1195 = vld [vmem:[%s1108 + $0x8] sm:$0xf]
      %v1196 = vld [vmem:[%s1108 + $0xc] sm:$0xff]
      %v1197 = vld [vmem:[%s1108 + $0x14] sm:$0xf]
      %v1198 = vld [vmem:[%s1108 + $0x18] sm:$0xff]
      %v1199 = vld [vmem:[%s1108 + $0x20] sm:$0xf]
      %v1200 = vld [vmem:[%s1108 + $0x24] sm:$0xff]
      %v1201 = vld [vmem:[%s1108 + $0x2c] sm:$0xf]
      %v1202 = vld [vmem:[%s1108 + $0x30] sm:$0xff]
      %v1203 = vld [vmem:[%s1108 + $0x38] sm:$0xf]
      %v1204 = vld [vmem:[%s1108 + $0x3c] sm:$0xff]
      %v1205 = vld [vmem:[%s1108 + $0x44] sm:$0xf]
      %v1206 = vld [vmem:[%s1108 + $0x48] sm:$0xff]
      %v1207 = vld [vmem:[%s1108 + $0x50] sm:$0xf]
      %v1208 = vld [vmem:[%s1108 + $0x54] sm:$0xff]
      %v1209 = vld [vmem:[%s1108 + $0x5c] sm:$0xf]
      %s1210 = scalar_lea.vmem %s2, 192
      %v1211 = vld [vmem:[%s1210] sm:$0xf]
      %v1212 = vld [vmem:[%s1210 + $0x4] sm:$0xf]
      %v1213 = vld [vmem:[%s1210 + $0x8] sm:$0xf]
      %v1214 = vld [vmem:[%s1210 + $0xc] sm:$0xf]
      %v1215 = vld [vmem:[%s1210 + $0x10] sm:$0xf]
      %v1216 = vld [vmem:[%s1210 + $0x14] sm:$0xf]
      %v1217 = vld [vmem:[%s1210 + $0x18] sm:$0xf]
      %v1218 = vld [vmem:[%s1210 + $0x1c] sm:$0xf]
      %v1219 = vld [vmem:[%s1210 + $0x20] sm:$0xf]
      %v1220 = vld [vmem:[%s1210 + $0x24] sm:$0xf]
      %v1221 = vld [vmem:[%s1210 + $0x28] sm:$0xf]
      %v1222 = vld [vmem:[%s1210 + $0x2c] sm:$0xf]
      %v1223 = vld [vmem:[%s1210 + $0x30] sm:$0xf]
      %v1224 = vld [vmem:[%s1210 + $0x34] sm:$0xf]
      %v1225 = vld [vmem:[%s1210 + $0x38] sm:$0xf]
      %v1226 = vld [vmem:[%s1210 + $0x3c] sm:$0xf]
      %v1227 = vld [vmem:[%s1210 + $0x40] sm:$0xf]
      %v1228 = vld [vmem:[%s1210 + $0x44] sm:$0xf]
      %v1229 = vld [vmem:[%s1210 + $0x48] sm:$0xf]
      %v1230 = vld [vmem:[%s1210 + $0x4c] sm:$0xf]
      %v1231 = vld [vmem:[%s1210 + $0x50] sm:$0xf]
      %v1232 = vld [vmem:[%s1210 + $0x54] sm:$0xf]
      %v1233 = vld [vmem:[%s1210 + $0x58] sm:$0xf]
      %v1234 = vld [vmem:[%s1210 + $0x5c] sm:$0xf]
      %v1235 = vld [vmem:[%s1210 + $0x60] sm:$0xf]
      %v1236 = vld [vmem:[%s1210 + $0x64] sm:$0xf]
      %v1237 = vld [vmem:[%s1210 + $0x68] sm:$0xf]
      %v1238 = vld [vmem:[%s1210 + $0x6c] sm:$0xf]
      %v1239 = vld [vmem:[%s1210 + $0x70] sm:$0xf]
      %v1240 = vld [vmem:[%s1210 + $0x74] sm:$0xf]
      %v1241 = vld [vmem:[%s1210 + $0x78] sm:$0xf]
      %v1242 = vld [vmem:[%s1210 + $0x7c] sm:$0xf]
      %v1243 = vld [vmem:[%s1210 + $0x80] sm:$0xf]
      %v1244 = vld [vmem:[%s1210 + $0x84] sm:$0xf]
      %v1245 = vld [vmem:[%s1210 + $0x88] sm:$0xf]
      %v1246 = vld [vmem:[%s1210 + $0x8c] sm:$0xf]
      %v1247 = vld [vmem:[%s1210 + $0x90] sm:$0xf]
      %v1248 = vld [vmem:[%s1210 + $0x94] sm:$0xf]
      %v1249 = vld [vmem:[%s1210 + $0x98] sm:$0xf]
      %v1250 = vld [vmem:[%s1210 + $0x9c] sm:$0xf]
      %v1251 = vld [vmem:[%s1210 + $0xa0] sm:$0xf]
      %v1252 = vld [vmem:[%s1210 + $0xa4] sm:$0xf]
      %v1253 = vld [vmem:[%s1210 + $0xa8] sm:$0xf]
      %v1254 = vld [vmem:[%s1210 + $0xac] sm:$0xf]
      %v1255 = vld [vmem:[%s1210 + $0xb0] sm:$0xf]
      %v1256 = vld [vmem:[%s1210 + $0xb4] sm:$0xf]
      %v1257 = vld [vmem:[%s1210 + $0xb8] sm:$0xf]
      %v1258 = vld [vmem:[%s1210 + $0xbc] sm:$0xf]
      %v1275 = vunpack.c.l.b16 %v1194
      %v1276 = vunpack.c.h.b16 %v1194
      %v1277 = vunpack.c.l.b16 %v1195
      %v1278 = vunpack.c.l.b16 %v1196
      %v1279 = vunpack.c.h.b16 %v1196
      %v1280 = vunpack.c.l.b16 %v1197
      %v1281 = vunpack.c.l.b16 %v1198
      %v1282 = vunpack.c.h.b16 %v1198
      %v1283 = vunpack.c.l.b16 %v1199
      %v1284 = vunpack.c.l.b16 %v1200
      %v1285 = vunpack.c.h.b16 %v1200
      %v1286 = vunpack.c.l.b16 %v1201
      %v1287 = vunpack.c.l.b16 %v1202
      %v1288 = vunpack.c.h.b16 %v1202
      %v1289 = vunpack.c.l.b16 %v1203
      %v1290 = vunpack.c.l.b16 %v1204
      %v1291 = vunpack.c.h.b16 %v1204
      %v1292 = vunpack.c.l.b16 %v1205
      %v1293 = vunpack.c.l.b16 %v1206
      %v1294 = vunpack.c.h.b16 %v1206
      %v1295 = vunpack.c.l.b16 %v1207
      %v1296 = vunpack.c.l.b16 %v1208
      %v1297 = vunpack.c.h.b16 %v1208
      %v1298 = vunpack.c.l.b16 %v1209
      %v1299 = vpack.c.b16 %v1278, %v1275
      %v1300 = vpack.c.b16 %v1279, %v1276
      %v1301 = vpack.c.b16 %v1280, %v1277
      %v1302 = vpack.c.b16 %v1284, %v1281
      %v1303 = vpack.c.b16 %v1285, %v1282
      %v1304 = vpack.c.b16 %v1286, %v1283
      %v1305 = vpack.c.b16 %v1290, %v1287
      %v1306 = vpack.c.b16 %v1291, %v1288
      %v1307 = vpack.c.b16 %v1292, %v1289
      %v1308 = vpack.c.b16 %v1296, %v1293
      %v1309 = vpack.c.b16 %v1297, %v1294
      %v1310 = vpack.c.b16 %v1298, %v1295
      %v1371 = vunpack.c.l.b16 %v1211
      %v1372 = vunpack.c.l.b16 %v1212
      %v1373 = vunpack.c.l.b16 %v1213
      %v1374 = vunpack.c.l.b16 %v1214
      %v1375 = vunpack.c.l.b16 %v1215
      %v1376 = vunpack.c.l.b16 %v1216
      %v1377 = vunpack.c.l.b16 %v1217
      %v1378 = vunpack.c.l.b16 %v1218
      %v1379 = vunpack.c.l.b16 %v1219
      %v1380 = vunpack.c.l.b16 %v1220
      %v1381 = vunpack.c.l.b16 %v1221
      %v1382 = vunpack.c.l.b16 %v1222
      %v1383 = vunpack.c.l.b16 %v1223
      %v1384 = vunpack.c.l.b16 %v1224
      %v1385 = vunpack.c.l.b16 %v1225
      %v1386 = vunpack.c.l.b16 %v1226
      %v1387 = vunpack.c.l.b16 %v1227
      %v1388 = vunpack.c.l.b16 %v1228
      %v1389 = vunpack.c.l.b16 %v1229
      %v1390 = vunpack.c.l.b16 %v1230
      %v1391 = vunpack.c.l.b16 %v1231
      %v1392 = vunpack.c.l.b16 %v1232
      %v1393 = vunpack.c.l.b16 %v1233
      %v1394 = vunpack.c.l.b16 %v1234
      %v1395 = vunpack.c.l.b16 %v1235
      %v1396 = vunpack.c.l.b16 %v1236
      %v1397 = vunpack.c.l.b16 %v1237
      %v1398 = vunpack.c.l.b16 %v1238
      %v1399 = vunpack.c.l.b16 %v1239
      %v1400 = vunpack.c.l.b16 %v1240
      %v1401 = vunpack.c.l.b16 %v1241
      %v1402 = vunpack.c.l.b16 %v1242
      %v1403 = vunpack.c.l.b16 %v1243
      %v1404 = vunpack.c.l.b16 %v1244
      %v1405 = vunpack.c.l.b16 %v1245
      %v1406 = vunpack.c.l.b16 %v1246
      %v1407 = vunpack.c.l.b16 %v1247
      %v1408 = vunpack.c.l.b16 %v1248
      %v1409 = vunpack.c.l.b16 %v1249
      %v1410 = vunpack.c.l.b16 %v1250
      %v1411 = vunpack.c.l.b16 %v1251
      %v1412 = vunpack.c.l.b16 %v1252
      %v1413 = vunpack.c.l.b16 %v1253
      %v1414 = vunpack.c.l.b16 %v1254
      %v1415 = vunpack.c.l.b16 %v1255
      %v1416 = vunpack.c.l.b16 %v1256
      %v1417 = vunpack.c.l.b16 %v1257
      %v1418 = vunpack.c.l.b16 %v1258
      %v1419 = vpack.c.b16 %v1372, %v1371
      %v1420 = vpack.c.b16 %v1374, %v1373
      %v1421 = vpack.c.b16 %v1376, %v1375
      %v1422 = vpack.c.b16 %v1378, %v1377
      %v1423 = vpack.c.b16 %v1380, %v1379
      %v1424 = vpack.c.b16 %v1382, %v1381
      %v1425 = vpack.c.b16 %v1384, %v1383
      %v1426 = vpack.c.b16 %v1386, %v1385
      %v1427 = vpack.c.b16 %v1388, %v1387
      %v1428 = vpack.c.b16 %v1390, %v1389
      %v1429 = vpack.c.b16 %v1392, %v1391
      %v1430 = vpack.c.b16 %v1394, %v1393
      %v1431 = vpack.c.b16 %v1396, %v1395
      %v1432 = vpack.c.b16 %v1398, %v1397
      %v1433 = vpack.c.b16 %v1400, %v1399
      %v1434 = vpack.c.b16 %v1402, %v1401
      %v1435 = vpack.c.b16 %v1404, %v1403
      %v1436 = vpack.c.b16 %v1406, %v1405
      %v1437 = vpack.c.b16 %v1408, %v1407
      %v1438 = vpack.c.b16 %v1410, %v1409
      %v1439 = vpack.c.b16 %v1412, %v1411
      %v1440 = vpack.c.b16 %v1414, %v1413
      %v1441 = vpack.c.b16 %v1416, %v1415
      %v1442 = vpack.c.b16 %v1418, %v1417
      %1467 = vmatprep.subr.bf16.mxu0 0
      %1468 = vmatpush1.bf16.msra.mxu0 %v1426
      %1469 = vmatprep.subr.bf16.mxu0 0
      %1470 = vmatpush1.bf16.msra.mxu0 %v1425
      %1471 = vmatprep.subr.bf16.mxu0 0
      %1472 = vmatpush1.bf16.msra.mxu0 %v1424
      %1473 = vmatprep.subr.bf16.mxu0 0
      %1474 = vmatpush1.bf16.msra.mxu0 %v1423
      %1475 = vmatprep.subr.bf16.mxu0 0
      %1476 = vmatpush1.bf16.msra.mxu0 %v1422
      %1477 = vmatprep.subr.bf16.mxu0 0
      %1478 = vmatpush1.bf16.msra.mxu0 %v1421
      %1479 = vmatprep.subr.bf16.mxu0 0
      %1480 = vmatpush1.bf16.msra.mxu0 %v1420
      %1481 = vmatprep.subr.bf16.mxu0 0
      %1482 = vmatpush1.bf16.msra.mxu0 %v1419
      %1483 = vmatprep.subr.bf16.mxu0 0
      %1484 = vmatpush2.bf16.msra.mxu0 %v1434
      %1485 = vmatprep.subr.bf16.mxu0 0
      %1486 = vmatpush2.bf16.msra.mxu0 %v1433
      %1487 = vmatprep.subr.bf16.mxu0 0
      %1488 = vmatpush2.bf16.msra.mxu0 %v1432
      %1489 = vmatprep.subr.bf16.mxu0 0
      %1490 = vmatpush2.bf16.msra.mxu0 %v1431
      %1491 = vmatprep.subr.bf16.mxu0 0
      %1492 = vmatpush2.bf16.msra.mxu0 %v1430
      %1493 = vmatprep.subr.bf16.mxu0 0
      %1494 = vmatpush2.bf16.msra.mxu0 %v1429
      %1495 = vmatprep.subr.bf16.mxu0 0
      %1496 = vmatpush2.bf16.msra.mxu0 %v1428
      %1497 = vmatprep.subr.bf16.mxu0 0
      %1498 = vmatpush2.bf16.msra.mxu0 %v1427
      %1499 = vmatprep.mubr.bf16.mxu0 %v1300
      %1500 = vmatmul.mubr.bf16.gmra.mxu0 %v1299
      %v1501 = vpop.f32.mrf.mxu0
      %v1502 = vadd.f32 0.0, %v1501
      %v1503 = vpop.f32.mrf.mxu0
      %v1504 = vpop.f32.mrf.mxu0
      %v1505 = vadd.f32 0.0, %v1504
      %v1506 = vpop.f32.mrf.mxu0
      %1507 = vmatprep.mubr.bf16.mxu0 %v1303
      %1508 = vmatmul.mubr.bf16.gmra.mxu0 %v1302
      %v1509 = vpop.f32.mrf.mxu0
      %v1510 = vadd.f32 0.0, %v1509
      %v1511 = vpop.f32.mrf.mxu0
      %v1512 = vpop.f32.mrf.mxu0
      %v1513 = vadd.f32 0.0, %v1512
      %v1514 = vpop.f32.mrf.mxu0
      %1515 = vmatprep.mubr.bf16.mxu0 %v1306
      %1516 = vmatmul.mubr.bf16.gmra.mxu0 %v1305
      %v1517 = vpop.f32.mrf.mxu0
      %v1518 = vadd.f32 0.0, %v1517
      %v1519 = vpop.f32.mrf.mxu0
      %v1520 = vpop.f32.mrf.mxu0
      %v1521 = vadd.f32 0.0, %v1520
      %v1522 = vpop.f32.mrf.mxu0
      %1523 = vmatprep.mubr.bf16.mxu0 %v1309
      %1524 = vmatmul.mubr.bf16.gmra.mxu0 %v1308
      %v1525 = vpop.f32.mrf.mxu0
      %v1526 = vadd.f32 0.0, %v1525
      %v1527 = vpop.f32.mrf.mxu0
      %v1528 = vpop.f32.mrf.mxu0
      %v1529 = vadd.f32 0.0, %v1528
      %v1530 = vpop.f32.mrf.mxu0
      %1531 = vdwg.mxu0
      %1532 = vmatprep.subr.bf16.mxu0 0
      %1533 = vmatpush1.bf16.msra.mxu0 %v1442
      %1534 = vmatprep.subr.bf16.mxu0 0
      %1535 = vmatpush1.bf16.msra.mxu0 %v1441
      %1536 = vmatprep.subr.bf16.mxu0 0
      %1537 = vmatpush1.bf16.msra.mxu0 %v1440
      %1538 = vmatprep.subr.bf16.mxu0 0
      %1539 = vmatpush1.bf16.msra.mxu0 %v1439
      %1540 = vmatprep.subr.bf16.mxu0 0
      %1541 = vmatpush1.bf16.msra.mxu0 %v1438
      %1542 = vmatprep.subr.bf16.mxu0 0
      %1543 = vmatpush1.bf16.msra.mxu0 %v1437
      %1544 = vmatprep.subr.bf16.mxu0 0
      %1545 = vmatpush1.bf16.msra.mxu0 %v1436
      %1546 = vmatprep.subr.bf16.mxu0 0
      %1547 = vmatpush1.bf16.msra.mxu0 %v1435
      %1548 = vmatprep.subr.bf16.mxu0 0
      %1549 = vmatpush2.bf16.msra.mxu0 0
      %1550 = vmatprep.subr.bf16.mxu0 0
      %1551 = vmatpush2.bf16.msra.mxu0 0
      %1552 = vmatprep.subr.bf16.mxu0 0
      %1553 = vmatpush2.bf16.msra.mxu0 0
      %1554 = vmatprep.subr.bf16.mxu0 0
      %1555 = vmatpush2.bf16.msra.mxu0 0
      %1556 = vmatprep.subr.bf16.mxu0 0
      %1557 = vmatpush2.bf16.msra.mxu0 0
      %1558 = vmatprep.subr.bf16.mxu0 0
      %1559 = vmatpush2.bf16.msra.mxu0 0
      %1560 = vmatprep.subr.bf16.mxu0 0
      %1561 = vmatpush2.bf16.msra.mxu0 0
      %1562 = vmatprep.subr.bf16.mxu0 0
      %1563 = vmatpush2.bf16.msra.mxu0 0
      %1564 = vmatprep.mubr.bf16.mxu0 0
      %1565 = vmatmul.mubr.bf16.gmra.mxu0 %v1301
      %v1566 = vpop.f32.mrf.mxu0
      %v1567 = vadd.f32 %v1502, %v1566
      %v1568 = vpop.f32.mrf.mxu0
      %v1569 = vpop.f32.mrf.mxu0
      %v1570 = vadd.f32 %v1505, %v1569
      %v1571 = vpop.f32.mrf.mxu0
      %1572 = vmatprep.mubr.bf16.mxu0 0
      %1573 = vmatmul.mubr.bf16.gmra.mxu0 %v1304
      %v1574 = vpop.f32.mrf.mxu0
      %v1575 = vadd.f32 %v1510, %v1574
      %v1576 = vpop.f32.mrf.mxu0
      %v1577 = vpop.f32.mrf.mxu0
      %v1578 = vadd.f32 %v1513, %v1577
      %v1579 = vpop.f32.mrf.mxu0
      %1580 = vmatprep.mubr.bf16.mxu0 0
      %1581 = vmatmul.mubr.bf16.gmra.mxu0 %v1307
      %v1582 = vpop.f32.mrf.mxu0
      %v1583 = vadd.f32 %v1518, %v1582
      %v1584 = vpop.f32.mrf.mxu0
      %v1585 = vpop.f32.mrf.mxu0
      %v1586 = vadd.f32 %v1521, %v1585
      %v1587 = vpop.f32.mrf.mxu0
      %1588 = vmatprep.mubr.bf16.mxu0 0
      %1589 = vmatmul.mubr.bf16.gmra.mxu0 %v1310
      %v1590 = vpop.f32.mrf.mxu0
      %v1591 = vadd.f32 %v1526, %v1590
      %v1592 = vpop.f32.mrf.mxu0
      %v1593 = vpop.f32.mrf.mxu0
      %v1594 = vadd.f32 %v1529, %v1593
      %v1595 = vpop.f32.mrf.mxu0
      %1596 = vdwg.mxu0
      %v1613 = vunpack.c.l.b16 %v1130
      %v1614 = vunpack.c.h.b16 %v1130
      %v1615 = vunpack.c.l.b16 %v1131
      %v1616 = vunpack.c.l.b16 %v1132
      %v1617 = vunpack.c.h.b16 %v1132
      %v1618 = vunpack.c.l.b16 %v1133
      %v1619 = vunpack.c.l.b16 %v1134
      %v1620 = vunpack.c.h.b16 %v1134
      %v1621 = vunpack.c.l.b16 %v1135
      %v1622 = vunpack.c.l.b16 %v1136
      %v1623 = vunpack.c.h.b16 %v1136
      %v1624 = vunpack.c.l.b16 %v1137
      %v1625 = vunpack.c.l.b16 %v1138
      %v1626 = vunpack.c.h.b16 %v1138
      %v1627 = vunpack.c.l.b16 %v1139
      %v1628 = vunpack.c.l.b16 %v1140
      %v1629 = vunpack.c.h.b16 %v1140
      %v1630 = vunpack.c.l.b16 %v1141
      %v1631 = vunpack.c.l.b16 %v1142
      %v1632 = vunpack.c.h.b16 %v1142
      %v1633 = vunpack.c.l.b16 %v1143
      %v1634 = vunpack.c.l.b16 %v1144
      %v1635 = vunpack.c.h.b16 %v1144
      %v1636 = vunpack.c.l.b16 %v1145
      %v1637 = vpack.c.b16 %v1616, %v1613
      %v1638 = vpack.c.b16 %v1617, %v1614
      %v1639 = vpack.c.b16 %v1618, %v1615
      %v1640 = vpack.c.b16 %v1622, %v1619
      %v1641 = vpack.c.b16 %v1623, %v1620
      %v1642 = vpack.c.b16 %v1624, %v1621
      %v1643 = vpack.c.b16 %v1628, %v1625
      %v1644 = vpack.c.b16 %v1629, %v1626
      %v1645 = vpack.c.b16 %v1630, %v1627
      %v1646 = vpack.c.b16 %v1634, %v1631
      %v1647 = vpack.c.b16 %v1635, %v1632
      %v1648 = vpack.c.b16 %v1636, %v1633
      %v1709 = vunpack.c.l.b16 %v1146
      %v1710 = vunpack.c.l.b16 %v1147
      %v1711 = vunpack.c.l.b16 %v1148
      %v1712 = vunpack.c.l.b16 %v1149
      %v1713 = vunpack.c.l.b16 %v1150
      %v1714 = vunpack.c.l.b16 %v1151
      %v1715 = vunpack.c.l.b16 %v1152
      %v1716 = vunpack.c.l.b16 %v1153
      %v1717 = vunpack.c.l.b16 %v1154
      %v1718 = vunpack.c.l.b16 %v1155
      %v1719 = vunpack.c.l.b16 %v1156
      %v1720 = vunpack.c.l.b16 %v1157
      %v1721 = vunpack.c.l.b16 %v1158
      %v1722 = vunpack.c.l.b16 %v1159
      %v1723 = vunpack.c.l.b16 %v1160
      %v1724 = vunpack.c.l.b16 %v1161
      %v1725 = vunpack.c.l.b16 %v1162
      %v1726 = vunpack.c.l.b16 %v1163
      %v1727 = vunpack.c.l.b16 %v1164
      %v1728 = vunpack.c.l.b16 %v1165
      %v1729 = vunpack.c.l.b16 %v1166
      %v1730 = vunpack.c.l.b16 %v1167
      %v1731 = vunpack.c.l.b16 %v1168
      %v1732 = vunpack.c.l.b16 %v1169
      %v1733 = vunpack.c.l.b16 %v1170
      %v1734 = vunpack.c.l.b16 %v1171
      %v1735 = vunpack.c.l.b16 %v1172
      %v1736 = vunpack.c.l.b16 %v1173
      %v1737 = vunpack.c.l.b16 %v1174
      %v1738 = vunpack.c.l.b16 %v1175
      %v1739 = vunpack.c.l.b16 %v1176
      %v1740 = vunpack.c.l.b16 %v1177
      %v1741 = vunpack.c.l.b16 %v1178
      %v1742 = vunpack.c.l.b16 %v1179
      %v1743 = vunpack.c.l.b16 %v1180
      %v1744 = vunpack.c.l.b16 %v1181
      %v1745 = vunpack.c.l.b16 %v1182
      %v1746 = vunpack.c.l.b16 %v1183
      %v1747 = vunpack.c.l.b16 %v1184
      %v1748 = vunpack.c.l.b16 %v1185
      %v1749 = vunpack.c.l.b16 %v1186
      %v1750 = vunpack.c.l.b16 %v1187
      %v1751 = vunpack.c.l.b16 %v1188
      %v1752 = vunpack.c.l.b16 %v1189
      %v1753 = vunpack.c.l.b16 %v1190
      %v1754 = vunpack.c.l.b16 %v1191
      %v1755 = vunpack.c.l.b16 %v1192
      %v1756 = vunpack.c.l.b16 %v1193
      %v1757 = vpack.c.b16 %v1710, %v1709
      %v1758 = vpack.c.b16 %v1712, %v1711
      %v1759 = vpack.c.b16 %v1714, %v1713
      %v1760 = vpack.c.b16 %v1716, %v1715
      %v1761 = vpack.c.b16 %v1718, %v1717
      %v1762 = vpack.c.b16 %v1720, %v1719
      %v1763 = vpack.c.b16 %v1722, %v1721
      %v1764 = vpack.c.b16 %v1724, %v1723
      %v1765 = vpack.c.b16 %v1726, %v1725
      %v1766 = vpack.c.b16 %v1728, %v1727
      %v1767 = vpack.c.b16 %v1730, %v1729
      %v1768 = vpack.c.b16 %v1732, %v1731
      %v1769 = vpack.c.b16 %v1734, %v1733
      %v1770 = vpack.c.b16 %v1736, %v1735
      %v1771 = vpack.c.b16 %v1738, %v1737
      %v1772 = vpack.c.b16 %v1740, %v1739
      %v1773 = vpack.c.b16 %v1742, %v1741
      %v1774 = vpack.c.b16 %v1744, %v1743
      %v1775 = vpack.c.b16 %v1746, %v1745
      %v1776 = vpack.c.b16 %v1748, %v1747
      %v1777 = vpack.c.b16 %v1750, %v1749
      %v1778 = vpack.c.b16 %v1752, %v1751
      %v1779 = vpack.c.b16 %v1754, %v1753
      %v1780 = vpack.c.b16 %v1756, %v1755
      %1805 = vmatprep.subr.bf16.mxu0 0
      %1806 = vmatpush1.bf16.msra.mxu0 %v1764
      %1807 = vmatprep.subr.bf16.mxu0 0
      %1808 = vmatpush1.bf16.msra.mxu0 %v1763
      %1809 = vmatprep.subr.bf16.mxu0 0
      %1810 = vmatpush1.bf16.msra.mxu0 %v1762
      %1811 = vmatprep.subr.bf16.mxu0 0
      %1812 = vmatpush1.bf16.msra.mxu0 %v1761
      %1813 = vmatprep.subr.bf16.mxu0 0
      %1814 = vmatpush1.bf16.msra.mxu0 %v1760
      %1815 = vmatprep.subr.bf16.mxu0 0
      %1816 = vmatpush1.bf16.msra.mxu0 %v1759
      %1817 = vmatprep.subr.bf16.mxu0 0
      %1818 = vmatpush1.bf16.msra.mxu0 %v1758
      %1819 = vmatprep.subr.bf16.mxu0 0
      %1820 = vmatpush1.bf16.msra.mxu0 %v1757
      %1821 = vmatprep.subr.bf16.mxu0 0
      %1822 = vmatpush2.bf16.msra.mxu0 %v1772
      %1823 = vmatprep.subr.bf16.mxu0 0
      %1824 = vmatpush2.bf16.msra.mxu0 %v1771
      %1825 = vmatprep.subr.bf16.mxu0 0
      %1826 = vmatpush2.bf16.msra.mxu0 %v1770
      %1827 = vmatprep.subr.bf16.mxu0 0
      %1828 = vmatpush2.bf16.msra.mxu0 %v1769
      %1829 = vmatprep.subr.bf16.mxu0 0
      %1830 = vmatpush2.bf16.msra.mxu0 %v1768
      %1831 = vmatprep.subr.bf16.mxu0 0
      %1832 = vmatpush2.bf16.msra.mxu0 %v1767
      %1833 = vmatprep.subr.bf16.mxu0 0
      %1834 = vmatpush2.bf16.msra.mxu0 %v1766
      %1835 = vmatprep.subr.bf16.mxu0 0
      %1836 = vmatpush2.bf16.msra.mxu0 %v1765
      %1837 = vmatprep.mubr.bf16.mxu0 %v1638
      %1838 = vmatmul.mubr.bf16.gmra.mxu0 %v1637
      %v1839 = vpop.f32.mrf.mxu0
      %v1840 = vadd.f32 %v1567, %v1839
      %v1841 = vpop.f32.mrf.mxu0
      %v1842 = vpop.f32.mrf.mxu0
      %v1843 = vadd.f32 %v1570, %v1842
      %v1844 = vpop.f32.mrf.mxu0
      %1845 = vmatprep.mubr.bf16.mxu0 %v1641
      %1846 = vmatmul.mubr.bf16.gmra.mxu0 %v1640
      %v1847 = vpop.f32.mrf.mxu0
      %v1848 = vadd.f32 %v1575, %v1847
      %v1849 = vpop.f32.mrf.mxu0
      %v1850 = vpop.f32.mrf.mxu0
      %v1851 = vadd.f32 %v1578, %v1850
      %v1852 = vpop.f32.mrf.mxu0
      %1853 = vmatprep.mubr.bf16.mxu0 %v1644
      %1854 = vmatmul.mubr.bf16.gmra.mxu0 %v1643
      %v1855 = vpop.f32.mrf.mxu0
      %v1856 = vadd.f32 %v1583, %v1855
      %v1857 = vpop.f32.mrf.mxu0
      %v1858 = vpop.f32.mrf.mxu0
      %v1859 = vadd.f32 %v1586, %v1858
      %v1860 = vpop.f32.mrf.mxu0
      %1861 = vmatprep.mubr.bf16.mxu0 %v1647
      %1862 = vmatmul.mubr.bf16.gmra.mxu0 %v1646
      %v1863 = vpop.f32.mrf.mxu0
      %v1864 = vadd.f32 %v1591, %v1863
      %v1865 = vpop.f32.mrf.mxu0
      %v1866 = vpop.f32.mrf.mxu0
      %v1867 = vadd.f32 %v1594, %v1866
      %v1868 = vpop.f32.mrf.mxu0
      %1869 = vdwg.mxu0
      %1870 = vmatprep.subr.bf16.mxu0 0
      %1871 = vmatpush1.bf16.msra.mxu0 %v1780
      %1872 = vmatprep.subr.bf16.mxu0 0
      %1873 = vmatpush1.bf16.msra.mxu0 %v1779
      %1874 = vmatprep.subr.bf16.mxu0 0
      %1875 = vmatpush1.bf16.msra.mxu0 %v1778
      %1876 = vmatprep.subr.bf16.mxu0 0
      %1877 = vmatpush1.bf16.msra.mxu0 %v1777
      %1878 = vmatprep.subr.bf16.mxu0 0
      %1879 = vmatpush1.bf16.msra.mxu0 %v1776
      %1880 = vmatprep.subr.bf16.mxu0 0
      %1881 = vmatpush1.bf16.msra.mxu0 %v1775
      %1882 = vmatprep.subr.bf16.mxu0 0
      %1883 = vmatpush1.bf16.msra.mxu0 %v1774
      %1884 = vmatprep.subr.bf16.mxu0 0
      %1885 = vmatpush1.bf16.msra.mxu0 %v1773
      %1886 = vmatprep.subr.bf16.mxu0 0
      %1887 = vmatpush2.bf16.msra.mxu0 0
      %1888 = vmatprep.subr.bf16.mxu0 0
      %1889 = vmatpush2.bf16.msra.mxu0 0
      %1890 = vmatprep.subr.bf16.mxu0 0
      %1891 = vmatpush2.bf16.msra.mxu0 0
      %1892 = vmatprep.subr.bf16.mxu0 0
      %1893 = vmatpush2.bf16.msra.mxu0 0
      %1894 = vmatprep.subr.bf16.mxu0 0
      %1895 = vmatpush2.bf16.msra.mxu0 0
      %1896 = vmatprep.subr.bf16.mxu0 0
      %1897 = vmatpush2.bf16.msra.mxu0 0
      %1898 = vmatprep.subr.bf16.mxu0 0
      %1899 = vmatpush2.bf16.msra.mxu0 0
      %1900 = vmatprep.subr.bf16.mxu0 0
      %1901 = vmatpush2.bf16.msra.mxu0 0
      %1902 = vmatprep.mubr.bf16.mxu0 0
      %1903 = vmatmul.mubr.bf16.gmra.mxu0 %v1639
      %v1904 = vpop.f32.mrf.mxu0
      %v1905 = vadd.f32 %v1840, %v1904
      %v1906 = vpop.f32.mrf.mxu0
      %v1907 = vpop.f32.mrf.mxu0
      %v1908 = vadd.f32 %v1843, %v1907
      %v1909 = vpop.f32.mrf.mxu0
      %1910 = vmatprep.mubr.bf16.mxu0 0
      %1911 = vmatmul.mubr.bf16.gmra.mxu0 %v1642
      %v1912 = vpop.f32.mrf.mxu0
      %v1913 = vadd.f32 %v1848, %v1912
      %v1914 = vpop.f32.mrf.mxu0
      %v1915 = vpop.f32.mrf.mxu0
      %v1916 = vadd.f32 %v1851, %v1915
      %v1917 = vpop.f32.mrf.mxu0
      %1918 = vmatprep.mubr.bf16.mxu0 0
      %1919 = vmatmul.mubr.bf16.gmra.mxu0 %v1645
      %v1920 = vpop.f32.mrf.mxu0
      %v1921 = vadd.f32 %v1856, %v1920
      %v1922 = vpop.f32.mrf.mxu0
      %v1923 = vpop.f32.mrf.mxu0
      %v1924 = vadd.f32 %v1859, %v1923
      %v1925 = vpop.f32.mrf.mxu0
      %1926 = vmatprep.mubr.bf16.mxu0 0
      %1927 = vmatmul.mubr.bf16.gmra.mxu0 %v1648
      %v1928 = vpop.f32.mrf.mxu0
      %v1929 = vadd.f32 %v1864, %v1928
      %v1930 = vpop.f32.mrf.mxu0
      %v1931 = vpop.f32.mrf.mxu0
      %v1932 = vadd.f32 %v1867, %v1931
      %v1933 = vpop.f32.mrf.mxu0
      %1934 = vdwg.mxu0
      %s1935 = scalar_lea.vmem [#allocation3], 24
      %v1936 = vld [vmem:[%s1935] sm:$0xff]
      %v1937 = vld [vmem:[%s1935 + $0x8] sm:$0xf]
      %v1938 = vld [vmem:[%s1935 + $0xc] sm:$0xff]
      %v1939 = vld [vmem:[%s1935 + $0x14] sm:$0xf]
      %v1940 = vld [vmem:[%s1935 + $0x18] sm:$0xff]
      %v1941 = vld [vmem:[%s1935 + $0x20] sm:$0xf]
      %v1942 = vld [vmem:[%s1935 + $0x24] sm:$0xff]
      %v1943 = vld [vmem:[%s1935 + $0x2c] sm:$0xf]
      %v1944 = vld [vmem:[%s1935 + $0x30] sm:$0xff]
      %v1945 = vld [vmem:[%s1935 + $0x38] sm:$0xf]
      %v1946 = vld [vmem:[%s1935 + $0x3c] sm:$0xff]
      %v1947 = vld [vmem:[%s1935 + $0x44] sm:$0xf]
      %v1948 = vld [vmem:[%s1935 + $0x48] sm:$0xff]
      %v1949 = vld [vmem:[%s1935 + $0x50] sm:$0xf]
      %v1950 = vld [vmem:[%s1935 + $0x54] sm:$0xff]
      %v1951 = vld [vmem:[%s1935 + $0x5c] sm:$0xf]
      %s1952 = scalar_lea.vmem %s2, 384
      %v1953 = vld [vmem:[%s1952] sm:$0xf]
      %v1954 = vld [vmem:[%s1952 + $0x4] sm:$0xf]
      %v1955 = vld [vmem:[%s1952 + $0x8] sm:$0xf]
      %v1956 = vld [vmem:[%s1952 + $0xc] sm:$0xf]
      %v1957 = vld [vmem:[%s1952 + $0x10] sm:$0xf]
      %v1958 = vld [vmem:[%s1952 + $0x14] sm:$0xf]
      %v1959 = vld [vmem:[%s1952 + $0x18] sm:$0xf]
      %v1960 = vld [vmem:[%s1952 + $0x1c] sm:$0xf]
      %v1961 = vld [vmem:[%s1952 + $0x20] sm:$0xf]
      %v1962 = vld [vmem:[%s1952 + $0x24] sm:$0xf]
      %v1963 = vld [vmem:[%s1952 + $0x28] sm:$0xf]
      %v1964 = vld [vmem:[%s1952 + $0x2c] sm:$0xf]
      %v1965 = vld [vmem:[%s1952 + $0x30] sm:$0xf]
      %v1966 = vld [vmem:[%s1952 + $0x34] sm:$0xf]
      %v1967 = vld [vmem:[%s1952 + $0x38] sm:$0xf]
      %v1968 = vld [vmem:[%s1952 + $0x3c] sm:$0xf]
      %v1969 = vld [vmem:[%s1952 + $0x40] sm:$0xf]
      %v1970 = vld [vmem:[%s1952 + $0x44] sm:$0xf]
      %v1971 = vld [vmem:[%s1952 + $0x48] sm:$0xf]
      %v1972 = vld [vmem:[%s1952 + $0x4c] sm:$0xf]
      %v1973 = vld [vmem:[%s1952 + $0x50] sm:$0xf]
      %v1974 = vld [vmem:[%s1952 + $0x54] sm:$0xf]
      %v1975 = vld [vmem:[%s1952 + $0x58] sm:$0xf]
      %v1976 = vld [vmem:[%s1952 + $0x5c] sm:$0xf]
      %v1977 = vld [vmem:[%s1952 + $0x60] sm:$0xf]
      %v1978 = vld [vmem:[%s1952 + $0x64] sm:$0xf]
      %v1979 = vld [vmem:[%s1952 + $0x68] sm:$0xf]
      %v1980 = vld [vmem:[%s1952 + $0x6c] sm:$0xf]
      %v1981 = vld [vmem:[%s1952 + $0x70] sm:$0xf]
      %v1982 = vld [vmem:[%s1952 + $0x74] sm:$0xf]
      %v1983 = vld [vmem:[%s1952 + $0x78] sm:$0xf]
      %v1984 = vld [vmem:[%s1952 + $0x7c] sm:$0xf]
      %v1985 = vld [vmem:[%s1952 + $0x80] sm:$0xf]
      %v1986 = vld [vmem:[%s1952 + $0x84] sm:$0xf]
      %v1987 = vld [vmem:[%s1952 + $0x88] sm:$0xf]
      %v1988 = vld [vmem:[%s1952 + $0x8c] sm:$0xf]
      %v1989 = vld [vmem:[%s1952 + $0x90] sm:$0xf]
      %v1990 = vld [vmem:[%s1952 + $0x94] sm:$0xf]
      %v1991 = vld [vmem:[%s1952 + $0x98] sm:$0xf]
      %v1992 = vld [vmem:[%s1952 + $0x9c] sm:$0xf]
      %v1993 = vld [vmem:[%s1952 + $0xa0] sm:$0xf]
      %v1994 = vld [vmem:[%s1952 + $0xa4] sm:$0xf]
      %v1995 = vld [vmem:[%s1952 + $0xa8] sm:$0xf]
      %v1996 = vld [vmem:[%s1952 + $0xac] sm:$0xf]
      %v1997 = vld [vmem:[%s1952 + $0xb0] sm:$0xf]
      %v1998 = vld [vmem:[%s1952 + $0xb4] sm:$0xf]
      %v1999 = vld [vmem:[%s1952 + $0xb8] sm:$0xf]
      %v2000 = vld [vmem:[%s1952 + $0xbc] sm:$0xf]
      %v2017 = vunpack.c.l.b16 %v1936
      %v2018 = vunpack.c.h.b16 %v1936
      %v2019 = vunpack.c.l.b16 %v1937
      %v2020 = vunpack.c.l.b16 %v1938
      %v2021 = vunpack.c.h.b16 %v1938
      %v2022 = vunpack.c.l.b16 %v1939
      %v2023 = vunpack.c.l.b16 %v1940
      %v2024 = vunpack.c.h.b16 %v1940
      %v2025 = vunpack.c.l.b16 %v1941
      %v2026 = vunpack.c.l.b16 %v1942
      %v2027 = vunpack.c.h.b16 %v1942
      %v2028 = vunpack.c.l.b16 %v1943
      %v2029 = vunpack.c.l.b16 %v1944
      %v2030 = vunpack.c.h.b16 %v1944
      %v2031 = vunpack.c.l.b16 %v1945
      %v2032 = vunpack.c.l.b16 %v1946
      %v2033 = vunpack.c.h.b16 %v1946
      %v2034 = vunpack.c.l.b16 %v1947
      %v2035 = vunpack.c.l.b16 %v1948
      %v2036 = vunpack.c.h.b16 %v1948
      %v2037 = vunpack.c.l.b16 %v1949
      %v2038 = vunpack.c.l.b16 %v1950
      %v2039 = vunpack.c.h.b16 %v1950
      %v2040 = vunpack.c.l.b16 %v1951
      %v2041 = vpack.c.b16 %v2020, %v2017
      %v2042 = vpack.c.b16 %v2021, %v2018
      %v2043 = vpack.c.b16 %v2022, %v2019
      %v2044 = vpack.c.b16 %v2026, %v2023
      %v2045 = vpack.c.b16 %v2027, %v2024
      %v2046 = vpack.c.b16 %v2028, %v2025
      %v2047 = vpack.c.b16 %v2032, %v2029
      %v2048 = vpack.c.b16 %v2033, %v2030
      %v2049 = vpack.c.b16 %v2034, %v2031
      %v2050 = vpack.c.b16 %v2038, %v2035
      %v2051 = vpack.c.b16 %v2039, %v2036
      %v2052 = vpack.c.b16 %v2040, %v2037
      %v2113 = vunpack.c.l.b16 %v1953
      %v2114 = vunpack.c.l.b16 %v1954
      %v2115 = vunpack.c.l.b16 %v1955
      %v2116 = vunpack.c.l.b16 %v1956
      %v2117 = vunpack.c.l.b16 %v1957
      %v2118 = vunpack.c.l.b16 %v1958
      %v2119 = vunpack.c.l.b16 %v1959
      %v2120 = vunpack.c.l.b16 %v1960
      %v2121 = vunpack.c.l.b16 %v1961
      %v2122 = vunpack.c.l.b16 %v1962
      %v2123 = vunpack.c.l.b16 %v1963
      %v2124 = vunpack.c.l.b16 %v1964
      %v2125 = vunpack.c.l.b16 %v1965
      %v2126 = vunpack.c.l.b16 %v1966
      %v2127 = vunpack.c.l.b16 %v1967
      %v2128 = vunpack.c.l.b16 %v1968
      %v2129 = vunpack.c.l.b16 %v1969
      %v2130 = vunpack.c.l.b16 %v1970
      %v2131 = vunpack.c.l.b16 %v1971
      %v2132 = vunpack.c.l.b16 %v1972
      %v2133 = vunpack.c.l.b16 %v1973
      %v2134 = vunpack.c.l.b16 %v1974
      %v2135 = vunpack.c.l.b16 %v1975
      %v2136 = vunpack.c.l.b16 %v1976
      %v2137 = vunpack.c.l.b16 %v1977
      %v2138 = vunpack.c.l.b16 %v1978
      %v2139 = vunpack.c.l.b16 %v1979
      %v2140 = vunpack.c.l.b16 %v1980
      %v2141 = vunpack.c.l.b16 %v1981
      %v2142 = vunpack.c.l.b16 %v1982
      %v2143 = vunpack.c.l.b16 %v1983
      %v2144 = vunpack.c.l.b16 %v1984
      %v2145 = vunpack.c.l.b16 %v1985
      %v2146 = vunpack.c.l.b16 %v1986
      %v2147 = vunpack.c.l.b16 %v1987
      %v2148 = vunpack.c.l.b16 %v1988
      %v2149 = vunpack.c.l.b16 %v1989
      %v2150 = vunpack.c.l.b16 %v1990
      %v2151 = vunpack.c.l.b16 %v1991
      %v2152 = vunpack.c.l.b16 %v1992
      %v2153 = vunpack.c.l.b16 %v1993
      %v2154 = vunpack.c.l.b16 %v1994
      %v2155 = vunpack.c.l.b16 %v1995
      %v2156 = vunpack.c.l.b16 %v1996
      %v2157 = vunpack.c.l.b16 %v1997
      %v2158 = vunpack.c.l.b16 %v1998
      %v2159 = vunpack.c.l.b16 %v1999
      %v2160 = vunpack.c.l.b16 %v2000
      %v2161 = vpack.c.b16 %v2114, %v2113
      %v2162 = vpack.c.b16 %v2116, %v2115
      %v2163 = vpack.c.b16 %v2118, %v2117
      %v2164 = vpack.c.b16 %v2120, %v2119
      %v2165 = vpack.c.b16 %v2122, %v2121
      %v2166 = vpack.c.b16 %v2124, %v2123
      %v2167 = vpack.c.b16 %v2126, %v2125
      %v2168 = vpack.c.b16 %v2128, %v2127
      %v2169 = vpack.c.b16 %v2130, %v2129
      %v2170 = vpack.c.b16 %v2132, %v2131
      %v2171 = vpack.c.b16 %v2134, %v2133
      %v2172 = vpack.c.b16 %v2136, %v2135
      %v2173 = vpack.c.b16 %v2138, %v2137
      %v2174 = vpack.c.b16 %v2140, %v2139
      %v2175 = vpack.c.b16 %v2142, %v2141
      %v2176 = vpack.c.b16 %v2144, %v2143
      %v2177 = vpack.c.b16 %v2146, %v2145
      %v2178 = vpack.c.b16 %v2148, %v2147
      %v2179 = vpack.c.b16 %v2150, %v2149
      %v2180 = vpack.c.b16 %v2152, %v2151
      %v2181 = vpack.c.b16 %v2154, %v2153
      %v2182 = vpack.c.b16 %v2156, %v2155
      %v2183 = vpack.c.b16 %v2158, %v2157
      %v2184 = vpack.c.b16 %v2160, %v2159
      %2209 = vmatprep.subr.bf16.mxu0 0
      %2210 = vmatpush1.bf16.msra.mxu0 %v2168
      %2211 = vmatprep.subr.bf16.mxu0 0
      %2212 = vmatpush1.bf16.msra.mxu0 %v2167
      %2213 = vmatprep.subr.bf16.mxu0 0
      %2214 = vmatpush1.bf16.msra.mxu0 %v2166
      %2215 = vmatprep.subr.bf16.mxu0 0
      %2216 = vmatpush1.bf16.msra.mxu0 %v2165
      %2217 = vmatprep.subr.bf16.mxu0 0
      %2218 = vmatpush1.bf16.msra.mxu0 %v2164
      %2219 = vmatprep.subr.bf16.mxu0 0
      %2220 = vmatpush1.bf16.msra.mxu0 %v2163
      %2221 = vmatprep.subr.bf16.mxu0 0
      %2222 = vmatpush1.bf16.msra.mxu0 %v2162
      %2223 = vmatprep.subr.bf16.mxu0 0
      %2224 = vmatpush1.bf16.msra.mxu0 %v2161
      %2225 = vmatprep.subr.bf16.mxu0 0
      %2226 = vmatpush2.bf16.msra.mxu0 %v2176
      %2227 = vmatprep.subr.bf16.mxu0 0
      %2228 = vmatpush2.bf16.msra.mxu0 %v2175
      %2229 = vmatprep.subr.bf16.mxu0 0
      %2230 = vmatpush2.bf16.msra.mxu0 %v2174
      %2231 = vmatprep.subr.bf16.mxu0 0
      %2232 = vmatpush2.bf16.msra.mxu0 %v2173
      %2233 = vmatprep.subr.bf16.mxu0 0
      %2234 = vmatpush2.bf16.msra.mxu0 %v2172
      %2235 = vmatprep.subr.bf16.mxu0 0
      %2236 = vmatpush2.bf16.msra.mxu0 %v2171
      %2237 = vmatprep.subr.bf16.mxu0 0
      %2238 = vmatpush2.bf16.msra.mxu0 %v2170
      %2239 = vmatprep.subr.bf16.mxu0 0
      %2240 = vmatpush2.bf16.msra.mxu0 %v2169
      %2241 = vmatprep.mubr.bf16.mxu0 %v2042
      %2242 = vmatmul.mubr.bf16.gmra.mxu0 %v2041
      %v2243 = vpop.f32.mrf.mxu0
      %v2244 = vadd.f32 0.0, %v2243
      %v2245 = vpop.f32.mrf.mxu0
      %v2246 = vpop.f32.mrf.mxu0
      %v2247 = vadd.f32 0.0, %v2246
      %v2248 = vpop.f32.mrf.mxu0
      %2249 = vmatprep.mubr.bf16.mxu0 %v2045
      %2250 = vmatmul.mubr.bf16.gmra.mxu0 %v2044
      %v2251 = vpop.f32.mrf.mxu0
      %v2252 = vadd.f32 0.0, %v2251
      %v2253 = vpop.f32.mrf.mxu0
      %v2254 = vpop.f32.mrf.mxu0
      %v2255 = vadd.f32 0.0, %v2254
      %v2256 = vpop.f32.mrf.mxu0
      %2257 = vmatprep.mubr.bf16.mxu0 %v2048
      %2258 = vmatmul.mubr.bf16.gmra.mxu0 %v2047
      %v2259 = vpop.f32.mrf.mxu0
      %v2260 = vadd.f32 0.0, %v2259
      %v2261 = vpop.f32.mrf.mxu0
      %v2262 = vpop.f32.mrf.mxu0
      %v2263 = vadd.f32 0.0, %v2262
      %v2264 = vpop.f32.mrf.mxu0
      %2265 = vmatprep.mubr.bf16.mxu0 %v2051
      %2266 = vmatmul.mubr.bf16.gmra.mxu0 %v2050
      %v2267 = vpop.f32.mrf.mxu0
      %v2268 = vadd.f32 0.0, %v2267
      %v2269 = vpop.f32.mrf.mxu0
      %v2270 = vpop.f32.mrf.mxu0
      %v2271 = vadd.f32 0.0, %v2270
      %v2272 = vpop.f32.mrf.mxu0
      %2273 = vdwg.mxu0
      %2274 = vmatprep.subr.bf16.mxu0 0
      %2275 = vmatpush1.bf16.msra.mxu0 %v2184
      %2276 = vmatprep.subr.bf16.mxu0 0
      %2277 = vmatpush1.bf16.msra.mxu0 %v2183
      %2278 = vmatprep.subr.bf16.mxu0 0
      %2279 = vmatpush1.bf16.msra.mxu0 %v2182
      %2280 = vmatprep.subr.bf16.mxu0 0
      %2281 = vmatpush1.bf16.msra.mxu0 %v2181
      %2282 = vmatprep.subr.bf16.mxu0 0
      %2283 = vmatpush1.bf16.msra.mxu0 %v2180
      %2284 = vmatprep.subr.bf16.mxu0 0
      %2285 = vmatpush1.bf16.msra.mxu0 %v2179
      %2286 = vmatprep.subr.bf16.mxu0 0
      %2287 = vmatpush1.bf16.msra.mxu0 %v2178
      %2288 = vmatprep.subr.bf16.mxu0 0
      %2289 = vmatpush1.bf16.msra.mxu0 %v2177
      %2290 = vmatprep.subr.bf16.mxu0 0
      %2291 = vmatpush2.bf16.msra.mxu0 0
      %2292 = vmatprep.subr.bf16.mxu0 0
      %2293 = vmatpush2.bf16.msra.mxu0 0
      %2294 = vmatprep.subr.bf16.mxu0 0
      %2295 = vmatpush2.bf16.msra.mxu0 0
      %2296 = vmatprep.subr.bf16.mxu0 0
      %2297 = vmatpush2.bf16.msra.mxu0 0
      %2298 = vmatprep.subr.bf16.mxu0 0
      %2299 = vmatpush2.bf16.msra.mxu0 0
      %2300 = vmatprep.subr.bf16.mxu0 0
      %2301 = vmatpush2.bf16.msra.mxu0 0
      %2302 = vmatprep.subr.bf16.mxu0 0
      %2303 = vmatpush2.bf16.msra.mxu0 0
      %2304 = vmatprep.subr.bf16.mxu0 0
      %2305 = vmatpush2.bf16.msra.mxu0 0
      %2306 = vmatprep.mubr.bf16.mxu0 0
      %2307 = vmatmul.mubr.bf16.gmra.mxu0 %v2043
      %v2308 = vpop.f32.mrf.mxu0
      %v2309 = vadd.f32 %v2244, %v2308
      %v2310 = vpop.f32.mrf.mxu0
      %v2311 = vpop.f32.mrf.mxu0
      %v2312 = vadd.f32 %v2247, %v2311
      %v2313 = vpop.f32.mrf.mxu0
      %2314 = vmatprep.mubr.bf16.mxu0 0
      %2315 = vmatmul.mubr.bf16.gmra.mxu0 %v2046
      %v2316 = vpop.f32.mrf.mxu0
      %v2317 = vadd.f32 %v2252, %v2316
      %v2318 = vpop.f32.mrf.mxu0
      %v2319 = vpop.f32.mrf.mxu0
      %v2320 = vadd.f32 %v2255, %v2319
      %v2321 = vpop.f32.mrf.mxu0
      %2322 = vmatprep.mubr.bf16.mxu0 0
      %2323 = vmatmul.mubr.bf16.gmra.mxu0 %v2049
      %v2324 = vpop.f32.mrf.mxu0
      %v2325 = vadd.f32 %v2260, %v2324
      %v2326 = vpop.f32.mrf.mxu0
      %v2327 = vpop.f32.mrf.mxu0
      %v2328 = vadd.f32 %v2263, %v2327
      %v2329 = vpop.f32.mrf.mxu0
      %2330 = vmatprep.mubr.bf16.mxu0 0
      %2331 = vmatmul.mubr.bf16.gmra.mxu0 %v2052
      %v2332 = vpop.f32.mrf.mxu0
      %v2333 = vadd.f32 %v2268, %v2332
      %v2334 = vpop.f32.mrf.mxu0
      %v2335 = vpop.f32.mrf.mxu0
      %v2336 = vadd.f32 %v2271, %v2335
      %v2337 = vpop.f32.mrf.mxu0
      %2338 = vdwg.mxu0
      %v2339 = vadd.f32 %v1905, %v2309
      %v2340 = vadd.f32 %v1908, %v2312
      %v2341 = vadd.f32 %v1913, %v2317
      %v2342 = vadd.f32 %v1916, %v2320
      %v2343 = vadd.f32 %v1921, %v2325
      %v2344 = vadd.f32 %v1924, %v2328
      %v2345 = vadd.f32 %v1929, %v2333
      %v2346 = vadd.f32 %v1932, %v2336
      %v2347 = vld [vmem:[%s4] sm:$0x1]
      %v2349 = vlaneseq
      %v2350 = vshrl.u32 %v2349, 7
      %v2351 = vsub.s32 0, %v2350
      %v2352 = vrot.slane %v2347, %v2351
      %v2354 = vadd.f32 %v2339, %v2352
      %v2355 = vadd.f32 %v2340, %v2352
      %v2356 = vadd.f32 %v2341, %v2352
      %v2357 = vadd.f32 %v2342, %v2352
      %v2358 = vadd.f32 %v2343, %v2352
      %v2359 = vadd.f32 %v2344, %v2352
      %v2360 = vadd.f32 %v2345, %v2352
      %v2361 = vadd.f32 %v2346, %v2352
      %vm2362 = vcmp.gt.f32.partialorder %v2354, 0.0
      %vm2363 = vcmp.gt.f32.partialorder %v2355, 0.0
      %vm2364 = vcmp.gt.f32.partialorder %v2356, 0.0
      %vm2365 = vcmp.gt.f32.partialorder %v2357, 0.0
      %vm2366 = vcmp.gt.f32.partialorder %v2358, 0.0
      %vm2367 = vcmp.gt.f32.partialorder %v2359, 0.0
      %vm2368 = vcmp.gt.f32.partialorder %v2360, 0.0
      %vm2369 = vcmp.gt.f32.partialorder %v2361, 0.0
      %v2370 = vmul.f32 %v2354, 0.01
      %v2371 = vmul.f32 %v2355, 0.01
      %v2372 = vmul.f32 %v2356, 0.01
      %v2373 = vmul.f32 %v2357, 0.01
      %v2374 = vmul.f32 %v2358, 0.01
      %v2375 = vmul.f32 %v2359, 0.01
      %v2376 = vmul.f32 %v2360, 0.01
      %v2377 = vmul.f32 %v2361, 0.01
      %v2378 = vsel %vm2362, %v2354, %v2370
      %v2379 = vsel %vm2363, %v2355, %v2371
      %v2380 = vsel %vm2364, %v2356, %v2372
      %v2381 = vsel %vm2365, %v2357, %v2373
      %v2382 = vsel %vm2366, %v2358, %v2374
      %v2383 = vsel %vm2367, %v2359, %v2375
      %v2384 = vsel %vm2368, %v2360, %v2376
      %v2385 = vsel %vm2369, %v2361, %v2377
      %2386 = vst.msk [vmem:[%s224] sm:$0xff] %vm481, %v2378
      %2387 = vst.msk [vmem:[%s224 + $0x8] sm:$0xff] %vm481, %v2379
      %2388 = vst.msk [vmem:[%s224 + $0x10] sm:$0xff] %vm481, %v2380
      %2389 = vst.msk [vmem:[%s224 + $0x18] sm:$0xff] %vm481, %v2381
      %2390 = vst.msk [vmem:[%s224 + $0x20] sm:$0xff] %vm481, %v2382
      %2391 = vst.msk [vmem:[%s224 + $0x28] sm:$0xff] %vm481, %v2383
      %2392 = vst.msk [vmem:[%s224 + $0x30] sm:$0xff] %vm481, %v2384
      %2393 = vst.msk [vmem:[%s224 + $0x38] sm:$0xff] %vm481, %v2385
      %p2394 = scmp.lt.s32.totalorder %s16, 1
      %s2395 = scalar_select %p2394, %s16, 1
      %s2396 = smul.addr %s2395, 8
      %s2397 = smul.addr %s2396, 8
      %s2398 = scalar_lea.vmem %s5, %s2397
      // Predicated region
      $region41: #{down_block_forward.1} parent=39 // pred_check
        %p2399 = pneg %p144
      $region42: #{down_block_forward.1} parent=39 // pred_check_branch
        %2401 = sbr.rel (%p2399) target = $region44
      $region43: #{down_block_forward.1} parent=39 // pred_region
        _
      $region44: #{down_block_forward.1} parent=39 // pred_fallthru
        _
    $region40: #{down_block_forward.1} parent=5 // pred_fallthru
      _
    %p2402 = scmp.le.s32.totalorder 2, %s11
    // Predicated region
    $region45: #{down_block_forward.1} parent=5 // pred_check
      %p2403 = pneg %p2402
    $region46: #{down_block_forward.1} parent=5 // pred_check_branch
      %2405 = sbr.rel (%p2403) target = $region48
    $region47: #{down_block_forward.1} parent=5 // pred_region
      %s2406 = ssub.s32 %s11, 2
      // Predicated region
      $region49: #{down_block_forward.1} parent=47 // pred_check
        %p2407 = pneg %p150
      $region50: #{down_block_forward.1} parent=47 // pred_check_branch
        %2409 = sbr.rel (%p2407) target = $region52
      $region51: #{down_block_forward.1} parent=47 // pred_region
        %p2410 = scmp.lt.s32.totalorder %s17, 1
        %s2411 = scalar_select %p2410, %s17, 1
        %s2412 = smul.addr %s2411, 8
        %s2413 = smul.addr %s2412, 8
        %s2414 = scalar_lea.vmem %s5, %s2413
      $region52: #{down_block_forward.1} parent=47 // pred_fallthru
        _
    $region48: #{down_block_forward.1} parent=5 // pred_fallthru
      _
  $region6: #{down_block_forward.1} parent=0 // loop_footer
    %s15 = sadd.s32 1, %s11
  $region7: #{down_block_forward.1} parent=0 // loop_footer_branch
    %10 = sbr.rel target = $region3
  $region8: #{down_block_forward.1} parent=0 // loop_exit
    _

</llo_original>
